<compile_context>
chip_gen: v5e
topology: v5e:2x2
jax: 0.10.0
libtpu: 0.0.40
codegen_flags: <defaults>
</compile_context>

<pallas_src>
import functools

import jax
import jax.numpy as jnp
from jax.experimental import pallas as pl
from jax.experimental.pallas import tpu as pltpu


# ----------------------------- in-kernel helpers -----------------------------

def _layernorm(x, w, b, eps=1e-5):
    # Two independent lane reductions (mean, mean of squares) -> less serialization.
    mean = jnp.mean(x, axis=-1, keepdims=True)
    mean2 = jnp.mean(x * x, axis=-1, keepdims=True)
    var = jnp.maximum(mean2 - mean * mean, 0.0)
    return (x - mean) * jax.lax.rsqrt(var + eps) * w + b


def _linear(x, w_ref, b_ref):
    # bf16 LHS x bf16 weight on the MXU, f32 accumulate, f32 bias add.
    return jnp.dot(x.astype(jnp.bfloat16), w_ref[...],
                   preferred_element_type=jnp.float32) + b_ref[...]


def _mha(q, k, v, kp_bias, attn_bias, n, num_heads):
    """PyTorch-style multi-head attention, all heads batched at once.

    q: (n*Lq, E) f32, k/v: (n*Lk, E) f32 (rows batch-major).
    kp_bias: (n, 1, Lk) additive f32 key-padding bias.
    attn_bias: (Lq, Lk) additive f32 attention mask, or None.
    Returns (n, Lq, E) f32 with lane order (head, head_dim).
    """
    e = q.shape[-1]
    d = e // num_heads
    lq = q.shape[0] // n
    lk = k.shape[0] // n
    scale = 1.0 / (d ** 0.5)

    q3 = q.reshape(n, lq, e)
    k3 = k.reshape(n, lk, e)
    v3 = v.reshape(n, lk, e)

    # Gather heads onto the leading batch axis (b = h*n + batch_idx): the whole
    # attention is then 2 batched MXU einsums + 1 softmax (no per-head loop).
    def gather(t):
        return jnp.concatenate(
            [t[:, :, h * d:(h + 1) * d] for h in range(num_heads)], axis=0
        ).astype(jnp.bfloat16)

    qh, kh, vh = gather(q3), gather(k3), gather(v3)

    s = jnp.einsum('bqd,bkd->bqk', qh, kh,
                   preferred_element_type=jnp.float32) * scale     # (H*n, Lq, Lk) f32
    bias = jnp.concatenate([kp_bias] * num_heads, axis=0)          # (H*n, 1, Lk)
    if attn_bias is not None:
        bias = bias + attn_bias[None, :, :]                        # + (1, Lq, Lk)
    s = s + bias
    s = s - jnp.max(s, axis=-1, keepdims=True)
    p = jnp.exp(s)
    p = p * pl.reciprocal(jnp.sum(p, axis=-1, keepdims=True), approx=True)

    o = jnp.einsum('bqk,bkd->bqd', p.astype(jnp.bfloat16), vh,
                   preferred_element_type=jnp.float32)             # (H*n, Lq, d)
    # Scatter heads back onto lanes in (head, head_dim) order (matches out_proj).
    return jnp.concatenate([o[h * n:(h + 1) * n] for h in range(num_heads)],
                           axis=-1)                                # (n, Lq, E)


# --------------------------------- kernel ------------------------------------

def _decoder_layer_kernel(
    x_ref, enc_ref, attn_mask_ref, kp_self_ref, kp_cross_ref, drop_ref,
    wqkv_s_ref, bqkv_s_ref, wo_s_ref, bo_s_ref,
    wq_c_ref, bq_c_ref, wkv_c_ref, bkv_c_ref, wo_c_ref, bo_c_ref,
    ln1w_ref, ln1b_ref, w1_ref, b1_ref, ln2w_ref, ln2b_ref,
    w2_ref, b2_ref, ln3w_ref, ln3b_ref,
    out_ref, *, num_heads,
):
    N, L, E = x_ref.shape
    S = enc_ref.shape[1]

    xf = x_ref[...].reshape(N * L, E)      # batch-major rows on the sublane axis
    encf = enc_ref[...].reshape(N * S, E)

    # --- masked self-attention + residual + norm1 ---
    qkv = _linear(xf, wqkv_s_ref, bqkv_s_ref)                 # fused (E,3E) projection
    attn = _mha(qkv[:, :E], qkv[:, E:2 * E], qkv[:, 2 * E:],
                kp_self_ref[...], attn_mask_ref[...], N, num_heads)
    sa = _linear(attn.reshape(N * L, E), wo_s_ref, bo_s_ref)
    sa = _layernorm(sa + xf, ln1w_ref[...], ln1b_ref[...])

    # --- cross-attention + residual + norm1 (reused, as in the torch module) ---
    qc = _linear(sa, wq_c_ref, bq_c_ref)
    kvc = _linear(encf, wkv_c_ref, bkv_c_ref)                 # fused (E,2E) K/V projection
    attn2 = _mha(qc, kvc[:, :E], kvc[:, E:],
                 kp_cross_ref[...], None, N, num_heads)
    ca = _linear(attn2.reshape(N * L, E), wo_c_ref, bo_c_ref)
    ca = _layernorm(ca + sa, ln1w_ref[...], ln1b_ref[...])

    # --- feed-forward: linear1 -> relu -> norm2 -> dropout -> linear2 ---
    ff = jnp.maximum(_linear(ca, w1_ref, b1_ref), 0.0)
    ff = _layernorm(ff, ln2w_ref[...], ln2b_ref[...])
    ff = ff.astype(jnp.bfloat16) * drop_ref[...]              # bf16 inverted-dropout mask
    ff = _linear(ff, w2_ref, b2_ref)

    out = _layernorm(ff + ca, ln3w_ref[...], ln3b_ref[...])
    out_ref[...] = out.reshape(N, L, E)


# --------------------------------- wrapper ------------------------------------

def decoder_layer_pallas(x, encoder_output, trg_attn_mask, trg_key_padding_mask,
                         src_key_padding_mask, params, *, num_heads,
                         dropout=True, drop_p=0.1, dropout_key=None):
    L, N, E = x.shape
    S = encoder_output.shape[0]
    Hf = params["w1"].shape[1]

    # seq-first (PyTorch MHA) -> batch-major for the kernel (tiny arrays).
    x_nle = jnp.transpose(x, (1, 0, 2)).astype(jnp.float32)                 # (N, L, E)
    enc_nse = jnp.transpose(encoder_output, (1, 0, 2)).astype(jnp.float32)  # (N, S, E)

    neg = jnp.float32(-1e9)  # instead of -inf so degenerate rows stay NaN-free
    attn_bias = trg_attn_mask.astype(jnp.float32)                           # (L, L)
    kp_self = jnp.where(trg_key_padding_mask, neg, 0.0)[:, None, :]         # (N, 1, L)
    kp_cross = jnp.where(src_key_padding_mask, neg, 0.0)[:, None, :]        # (N, 1, S)

    if dropout:
        keep = jax.random.bernoulli(dropout_key, 1.0 - drop_p, (N * L, Hf))
        drop_mask = (keep.astype(jnp.float32) / (1.0 - drop_p)).astype(jnp.bfloat16)
    else:
        drop_mask = jnp.ones((N * L, Hf), jnp.bfloat16)

    r32 = lambda a: a.reshape(1, -1).astype(jnp.float32)   # biases / LN params (f32)
    bw = lambda a: a.astype(jnp.bfloat16)                  # matmul weights (bf16)

    kernel = functools.partial(_decoder_layer_kernel, num_heads=num_heads)

    # Single invocation: the whole working set (< 1 MB) lives in VMEM, so all
    # operands are whole-array blocks.  At realistic N/L, add a "parallel" grid
    # over batch/row tiles here so v7x's second TensorCore is used.
    out_nle = pl.pallas_call(
        kernel,
        out_shape=jax.ShapeDtypeStruct((N, L, E), jnp.float32),
        compiler_params=pltpu.CompilerParams(vmem_limit_bytes=32 * 1024 * 1024),
    )(x_nle, enc_nse, attn_bias, kp_self, kp_cross, drop_mask,
      bw(params["wqkv_self"]), r32(params["bqkv_self"]),
      bw(params["wo_self"]), r32(params["bo_self"]),
      bw(params["wq_cross"]), r32(params["bq_cross"]),
      bw(params["wkv_cross"]), r32(params["bkv_cross"]),
      bw(params["wo_cross"]), r32(params["bo_cross"]),
      r32(params["ln1_w"]), r32(params["ln1_b"]),
      bw(params["w1"]), r32(params["b1"]),
      r32(params["ln2_w"]), r32(params["ln2_b"]),
      bw(params["w2"]), r32(params["b2"]),
      r32(params["ln3_w"]), r32(params["ln3_b"]))

    return jnp.transpose(out_nle, (1, 0, 2))  # back to (L, N, E)


# ----------------------------- parameter init ---------------------------------

def init_params(key, embed_dim, hidden_dim):
    """Weights in 'for-dot' layout: y = x @ W + b (already transposed vs torch)."""
    E, Hf = embed_dim, hidden_dim
    ks = jax.random.split(key, 14)

    def w(k, shape, scale=0.05):
        return scale * jax.random.normal(k, shape, dtype=jnp.float32)

    return dict(
        wqkv_self=w(ks[0], (E, 3 * E)), bqkv_self=w(ks[1], (3 * E,)),
        wo_self=w(ks[2], (E, E)), bo_self=w(ks[3], (E,)),
        wq_cross=w(ks[4], (E, E)), bq_cross=w(ks[5], (E,)),
        wkv_cross=w(ks[6], (E, 2 * E)), bkv_cross=w(ks[7], (2 * E,)),
        ln1_w=jnp.ones((E,), jnp.float32), ln1_b=jnp.zeros((E,), jnp.float32),
        wo_cross=w(ks[8], (E, E)), bo_cross=w(ks[9], (E,)),
        w1=w(ks[10], (E, Hf)), b1=w(ks[11], (Hf,)),
        ln2_w=jnp.ones((Hf,), jnp.float32), ln2_b=jnp.zeros((Hf,), jnp.float32),
        w2=w(ks[12], (Hf, E)), b2=w(ks[13], (E,)),
        ln3_w=jnp.ones((E,), jnp.float32), ln3_b=jnp.zeros((E,), jnp.float32),
    )


# ----------------------------------- main --------------------------------------

if __name__ == "__main__":
    embed_dim, hidden_dim, num_heads = 128, 256, 4   # lane-dense (multiples of 128)
    L, S, N = 8, 8, 2                                # target seq, source seq, batch

    key = jax.random.PRNGKey(0)
    kx, ke, kp, kd = jax.random.split(key, 4)

    x = jax.random.normal(kx, (L, N, embed_dim), dtype=jnp.float32)
    encoder_output = jax.random.normal(ke, (S, N, embed_dim), dtype=jnp.float32)

    # Causal additive attention mask (-1e9 instead of -inf for NaN safety).
    trg_attn_mask = jnp.triu(jnp.full((L, L), -1e9, jnp.float32), k=1)
    trg_key_padding_mask = jnp.zeros((N, L), dtype=bool).at[1, L - 1].set(True)
    src_key_padding_mask = jnp.zeros((N, S), dtype=bool).at[0, S - 2:].set(True)

    params = init_params(kp, embed_dim, hidden_dim)

    out = decoder_layer_pallas(
        x, encoder_output, trg_attn_mask, trg_key_padding_mask,
        src_key_padding_mask, params, num_heads=num_heads,
        dropout=True, dropout_key=kd)
    out = jax.block_until_ready(out)

    assert out.shape == (L, N, embed_dim)
    assert bool(jnp.all(jnp.isfinite(out)))
    print("KERNEL_OK")
</pallas_src>

<mosaic_0001>
module attributes {stable_mosaic.version = 11 : i64} {
  func.func @_decoder_layer_kernel(%arg0: memref<2x8x128xf32, #tpu.memory_space<vmem>>, %arg1: memref<2x8x128xf32, #tpu.memory_space<vmem>>, %arg2: memref<8x8xf32, #tpu.memory_space<vmem>>, %arg3: memref<2x1x8xf32, #tpu.memory_space<vmem>>, %arg4: memref<2x1x8xf32, #tpu.memory_space<vmem>>, %arg5: memref<16x256xbf16, #tpu.memory_space<vmem>>, %arg6: memref<128x384xbf16, #tpu.memory_space<vmem>>, %arg7: memref<1x384xf32, #tpu.memory_space<vmem>>, %arg8: memref<128x128xbf16, #tpu.memory_space<vmem>>, %arg9: memref<1x128xf32, #tpu.memory_space<vmem>>, %arg10: memref<128x128xbf16, #tpu.memory_space<vmem>>, %arg11: memref<1x128xf32, #tpu.memory_space<vmem>>, %arg12: memref<128x256xbf16, #tpu.memory_space<vmem>>, %arg13: memref<1x256xf32, #tpu.memory_space<vmem>>, %arg14: memref<128x128xbf16, #tpu.memory_space<vmem>>, %arg15: memref<1x128xf32, #tpu.memory_space<vmem>>, %arg16: memref<1x128xf32, #tpu.memory_space<vmem>>, %arg17: memref<1x128xf32, #tpu.memory_space<vmem>>, %arg18: memref<128x256xbf16, #tpu.memory_space<vmem>>, %arg19: memref<1x256xf32, #tpu.memory_space<vmem>>, %arg20: memref<1x256xf32, #tpu.memory_space<vmem>>, %arg21: memref<1x256xf32, #tpu.memory_space<vmem>>, %arg22: memref<256x128xbf16, #tpu.memory_space<vmem>>, %arg23: memref<1x128xf32, #tpu.memory_space<vmem>>, %arg24: memref<1x128xf32, #tpu.memory_space<vmem>>, %arg25: memref<1x128xf32, #tpu.memory_space<vmem>>, %arg26: memref<2x8x128xf32, #tpu.memory_space<vmem>>) attributes {dimension_semantics = [], scalar_prefetch = 0 : i64, scratch_operands = 0 : i64, tpu.core_type = #tpu.core_type<tc>} {
    %c0 = arith.constant 0 : index
    %c0_0 = arith.constant 0 : index
    %c0_1 = arith.constant 0 : index
    %0 = vector.load %arg0[%c0, %c0_0, %c0_1] : memref<2x8x128xf32, #tpu.memory_space<vmem>>, vector<2x8x128xf32>
    %1 = vector.shape_cast %0 : vector<2x8x128xf32> to vector<16x128xf32>
    %c0_2 = arith.constant 0 : index
    %c0_3 = arith.constant 0 : index
    %c0_4 = arith.constant 0 : index
    %2 = vector.load %arg1[%c0_2, %c0_3, %c0_4] : memref<2x8x128xf32, #tpu.memory_space<vmem>>, vector<2x8x128xf32>
    %3 = vector.shape_cast %2 : vector<2x8x128xf32> to vector<16x128xf32>
    %4 = arith.truncf %1 : vector<16x128xf32> to vector<16x128xbf16>
    %c0_5 = arith.constant 0 : index
    %c0_6 = arith.constant 0 : index
    %5 = vector.load %arg6[%c0_5, %c0_6] : memref<128x384xbf16, #tpu.memory_space<vmem>>, vector<128x384xbf16>
    %cst = arith.constant dense<0.000000e+00> : vector<16x384xf32>
    %6 = tpu.matmul %4, %5, %cst {dimension_numbers = #tpu.dot_dimension_numbers<[1], [0], [0], [1], [0, 0, 1, 1], [], []>} : vector<16x128xbf16>, vector<128x384xbf16>, vector<16x384xf32> -> vector<16x384xf32>
    %c0_7 = arith.constant 0 : index
    %c0_8 = arith.constant 0 : index
    %7 = vector.load %arg7[%c0_7, %c0_8] : memref<1x384xf32, #tpu.memory_space<vmem>>, vector<1x384xf32>
    %8 = vector.broadcast %7 : vector<1x384xf32> to vector<16x384xf32>
    %9 = arith.addf %6, %8 : vector<16x384xf32>
    %10 = vector.extract_strided_slice %9 {offsets = [0, 0], sizes = [16, 128], strides = [1, 1]} : vector<16x384xf32> to vector<16x128xf32>
    %11 = vector.extract_strided_slice %9 {offsets = [0, 128], sizes = [16, 128], strides = [1, 1]} : vector<16x384xf32> to vector<16x128xf32>
    %12 = vector.extract_strided_slice %9 {offsets = [0, 256], sizes = [16, 128], strides = [1, 1]} : vector<16x384xf32> to vector<16x128xf32>
    %c0_9 = arith.constant 0 : index
    %c0_10 = arith.constant 0 : index
    %c0_11 = arith.constant 0 : index
    %13 = vector.load %arg3[%c0_9, %c0_10, %c0_11] : memref<2x1x8xf32, #tpu.memory_space<vmem>>, vector<2x1x8xf32>
    %c0_12 = arith.constant 0 : index
    %c0_13 = arith.constant 0 : index
    %14 = vector.load %arg2[%c0_12, %c0_13] : memref<8x8xf32, #tpu.memory_space<vmem>>, vector<8x8xf32>
    %15 = vector.shape_cast %10 : vector<16x128xf32> to vector<2x8x128xf32>
    %16 = vector.shape_cast %11 : vector<16x128xf32> to vector<2x8x128xf32>
    %17 = vector.shape_cast %12 : vector<16x128xf32> to vector<2x8x128xf32>
    %18 = vector.extract_strided_slice %15 {offsets = [0, 0, 0], sizes = [2, 8, 32], strides = [1, 1, 1]} : vector<2x8x128xf32> to vector<2x8x32xf32>
    %19 = vector.extract_strided_slice %15 {offsets = [0, 0, 32], sizes = [2, 8, 32], strides = [1, 1, 1]} : vector<2x8x128xf32> to vector<2x8x32xf32>
    %20 = vector.extract_strided_slice %15 {offsets = [0, 0, 64], sizes = [2, 8, 32], strides = [1, 1, 1]} : vector<2x8x128xf32> to vector<2x8x32xf32>
    %21 = vector.extract_strided_slice %15 {offsets = [0, 0, 96], sizes = [2, 8, 32], strides = [1, 1, 1]} : vector<2x8x128xf32> to vector<2x8x32xf32>
    %22 = tpu.concatenate %18, %19, %20, %21 in 0 : vector<2x8x32xf32>, vector<2x8x32xf32>, vector<2x8x32xf32>, vector<2x8x32xf32> -> vector<8x8x32xf32>
    %23 = arith.truncf %22 : vector<8x8x32xf32> to vector<8x8x32xbf16>
    %24 = vector.extract_strided_slice %16 {offsets = [0, 0, 0], sizes = [2, 8, 32], strides = [1, 1, 1]} : vector<2x8x128xf32> to vector<2x8x32xf32>
    %25 = vector.extract_strided_slice %16 {offsets = [0, 0, 32], sizes = [2, 8, 32], strides = [1, 1, 1]} : vector<2x8x128xf32> to vector<2x8x32xf32>
    %26 = vector.extract_strided_slice %16 {offsets = [0, 0, 64], sizes = [2, 8, 32], strides = [1, 1, 1]} : vector<2x8x128xf32> to vector<2x8x32xf32>
    %27 = vector.extract_strided_slice %16 {offsets = [0, 0, 96], sizes = [2, 8, 32], strides = [1, 1, 1]} : vector<2x8x128xf32> to vector<2x8x32xf32>
    %28 = tpu.concatenate %24, %25, %26, %27 in 0 : vector<2x8x32xf32>, vector<2x8x32xf32>, vector<2x8x32xf32>, vector<2x8x32xf32> -> vector<8x8x32xf32>
    %29 = arith.truncf %28 : vector<8x8x32xf32> to vector<8x8x32xbf16>
    %30 = vector.extract_strided_slice %17 {offsets = [0, 0, 0], sizes = [2, 8, 32], strides = [1, 1, 1]} : vector<2x8x128xf32> to vector<2x8x32xf32>
    %31 = vector.extract_strided_slice %17 {offsets = [0, 0, 32], sizes = [2, 8, 32], strides = [1, 1, 1]} : vector<2x8x128xf32> to vector<2x8x32xf32>
    %32 = vector.extract_strided_slice %17 {offsets = [0, 0, 64], sizes = [2, 8, 32], strides = [1, 1, 1]} : vector<2x8x128xf32> to vector<2x8x32xf32>
    %33 = vector.extract_strided_slice %17 {offsets = [0, 0, 96], sizes = [2, 8, 32], strides = [1, 1, 1]} : vector<2x8x128xf32> to vector<2x8x32xf32>
    %34 = tpu.concatenate %30, %31, %32, %33 in 0 : vector<2x8x32xf32>, vector<2x8x32xf32>, vector<2x8x32xf32>, vector<2x8x32xf32> -> vector<8x8x32xf32>
    %35 = arith.truncf %34 : vector<8x8x32xf32> to vector<8x8x32xbf16>
    "tpu.trace_start"() <{level = 10 : i32, message = "bqd,bkd->bqk"}> : () -> ()
    %cst_14 = arith.constant dense<0.000000e+00> : vector<8x8x8xf32>
    %36 = tpu.matmul %23, %29, %cst_14 {dimension_numbers = #tpu.dot_dimension_numbers<[2], [2], [1], [1], [0, 0, 0, 1, 1, 1], [0], [0]>} : vector<8x8x32xbf16>, vector<8x8x32xbf16>, vector<8x8x8xf32> -> vector<8x8x8xf32>
    "tpu.trace_stop"() : () -> ()
    %cst_15 = arith.constant 0.176776692 : f32
    %37 = vector.broadcast %cst_15 : f32 to vector<8x8x8xf32>
    %38 = arith.mulf %36, %37 : vector<8x8x8xf32>
    %39 = tpu.concatenate %13, %13, %13, %13 in 0 : vector<2x1x8xf32>, vector<2x1x8xf32>, vector<2x1x8xf32>, vector<2x1x8xf32> -> vector<8x1x8xf32>
    %40 = vector.shape_cast %14 : vector<8x8xf32> to vector<1x8x8xf32>
    %41 = vector.broadcast %39 : vector<8x1x8xf32> to vector<8x8x8xf32>
    %42 = vector.broadcast %40 : vector<1x8x8xf32> to vector<8x8x8xf32>
    %43 = arith.addf %41, %42 : vector<8x8x8xf32>
    %44 = arith.addf %38, %43 : vector<8x8x8xf32>
    %cst_16 = arith.constant dense<0xFF800000> : vector<8x8xf32>
    %45 = vector.multi_reduction <maximumf>, %44, %cst_16 [2] : vector<8x8x8xf32> to vector<8x8xf32>
    %46 = vector.shape_cast %45 : vector<8x8xf32> to vector<8x8x1xf32>
    %47 = vector.broadcast %46 : vector<8x8x1xf32> to vector<8x8x8xf32>
    %48 = arith.subf %44, %47 : vector<8x8x8xf32>
    %49 = math.exp %48 : vector<8x8x8xf32>
    %cst_17 = arith.constant dense<0.000000e+00> : vector<8x8xf32>
    %50 = vector.multi_reduction <add>, %49, %cst_17 [2] : vector<8x8x8xf32> to vector<8x8xf32>
    %51 = vector.shape_cast %50 : vector<8x8xf32> to vector<8x8x1xf32>
    %52 = tpu.reciprocal %51 {approx = true} : vector<8x8x1xf32> -> vector<8x8x1xf32>
    %53 = vector.broadcast %52 : vector<8x8x1xf32> to vector<8x8x8xf32>
    %54 = arith.mulf %49, %53 : vector<8x8x8xf32>
    %55 = arith.truncf %54 : vector<8x8x8xf32> to vector<8x8x8xbf16>
    "tpu.trace_start"() <{level = 10 : i32, message = "bqk,bkd->bqd"}> : () -> ()
    %cst_18 = arith.constant dense<0.000000e+00> : vector<8x8x32xf32>
    %56 = tpu.matmul %55, %35, %cst_18 {dimension_numbers = #tpu.dot_dimension_numbers<[2], [1], [1], [2], [0, 0, 0, 1, 1, 2], [0], [0]>} : vector<8x8x8xbf16>, vector<8x8x32xbf16>, vector<8x8x32xf32> -> vector<8x8x32xf32>
    "tpu.trace_stop"() : () -> ()
    %57 = vector.extract_strided_slice %56 {offsets = [0, 0, 0], sizes = [2, 8, 32], strides = [1, 1, 1]} : vector<8x8x32xf32> to vector<2x8x32xf32>
    %58 = vector.extract_strided_slice %56 {offsets = [2, 0, 0], sizes = [2, 8, 32], strides = [1, 1, 1]} : vector<8x8x32xf32> to vector<2x8x32xf32>
    %59 = vector.extract_strided_slice %56 {offsets = [4, 0, 0], sizes = [2, 8, 32], strides = [1, 1, 1]} : vector<8x8x32xf32> to vector<2x8x32xf32>
    %60 = vector.extract_strided_slice %56 {offsets = [6, 0, 0], sizes = [2, 8, 32], strides = [1, 1, 1]} : vector<8x8x32xf32> to vector<2x8x32xf32>
    %61 = tpu.concatenate %57, %58, %59, %60 in 2 : vector<2x8x32xf32>, vector<2x8x32xf32>, vector<2x8x32xf32>, vector<2x8x32xf32> -> vector<2x8x128xf32>
    %62 = vector.shape_cast %61 : vector<2x8x128xf32> to vector<16x128xf32>
    %63 = arith.truncf %62 : vector<16x128xf32> to vector<16x128xbf16>
    %c0_19 = arith.constant 0 : index
    %c0_20 = arith.constant 0 : index
    %64 = vector.load %arg8[%c0_19, %c0_20] : memref<128x128xbf16, #tpu.memory_space<vmem>>, vector<128x128xbf16>
    %cst_21 = arith.constant dense<0.000000e+00> : vector<16x128xf32>
    %65 = tpu.matmul %63, %64, %cst_21 {dimension_numbers = #tpu.dot_dimension_numbers<[1], [0], [0], [1], [0, 0, 1, 1], [], []>} : vector<16x128xbf16>, vector<128x128xbf16>, vector<16x128xf32> -> vector<16x128xf32>
    %c0_22 = arith.constant 0 : index
    %c0_23 = arith.constant 0 : index
    %66 = vector.load %arg9[%c0_22, %c0_23] : memref<1x128xf32, #tpu.memory_space<vmem>>, vector<1x128xf32>
    %67 = vector.broadcast %66 : vector<1x128xf32> to vector<16x128xf32>
    %68 = arith.addf %65, %67 : vector<16x128xf32>
    %69 = arith.addf %68, %1 : vector<16x128xf32>
    %c0_24 = arith.constant 0 : index
    %c0_25 = arith.constant 0 : index
    %70 = vector.load %arg16[%c0_24, %c0_25] : memref<1x128xf32, #tpu.memory_space<vmem>>, vector<1x128xf32>
    %c0_26 = arith.constant 0 : index
    %c0_27 = arith.constant 0 : index
    %71 = vector.load %arg17[%c0_26, %c0_27] : memref<1x128xf32, #tpu.memory_space<vmem>>, vector<1x128xf32>
    %cst_28 = arith.constant dense<0.000000e+00> : vector<16xf32>
    %72 = vector.multi_reduction <add>, %69, %cst_28 [1] : vector<16x128xf32> to vector<16xf32>
    %73 = vector.shape_cast %72 : vector<16xf32> to vector<16x1xf32>
    %cst_29 = arith.constant 1.280000e+02 : f32
    %74 = vector.broadcast %cst_29 : f32 to vector<16x1xf32>
    %75 = arith.divf %73, %74 : vector<16x1xf32>
    %76 = arith.mulf %69, %69 : vector<16x128xf32>
    %cst_30 = arith.constant dense<0.000000e+00> : vector<16xf32>
    %77 = vector.multi_reduction <add>, %76, %cst_30 [1] : vector<16x128xf32> to vector<16xf32>
    %78 = vector.shape_cast %77 : vector<16xf32> to vector<16x1xf32>
    %cst_31 = arith.constant 1.280000e+02 : f32
    %79 = vector.broadcast %cst_31 : f32 to vector<16x1xf32>
    %80 = arith.divf %78, %79 : vector<16x1xf32>
    %81 = arith.mulf %75, %75 : vector<16x1xf32>
    %82 = arith.subf %80, %81 : vector<16x1xf32>
    %cst_32 = arith.constant 0.000000e+00 : f32
    %83 = vector.broadcast %cst_32 : f32 to vector<16x1xf32>
    %84 = arith.maximumf %82, %83 : vector<16x1xf32>
    %85 = vector.broadcast %75 : vector<16x1xf32> to vector<16x128xf32>
    %86 = arith.subf %69, %85 : vector<16x128xf32>
    %cst_33 = arith.constant 9.99999974E-6 : f32
    %87 = vector.broadcast %cst_33 : f32 to vector<16x1xf32>
    %88 = arith.addf %84, %87 : vector<16x1xf32>
    %89 = math.rsqrt %88 : vector<16x1xf32>
    %90 = vector.broadcast %89 : vector<16x1xf32> to vector<16x128xf32>
    %91 = arith.mulf %86, %90 : vector<16x128xf32>
    %92 = vector.broadcast %70 : vector<1x128xf32> to vector<16x128xf32>
    %93 = arith.mulf %91, %92 : vector<16x128xf32>
    %94 = vector.broadcast %71 : vector<1x128xf32> to vector<16x128xf32>
    %95 = arith.addf %93, %94 : vector<16x128xf32>
    %96 = arith.truncf %95 : vector<16x128xf32> to vector<16x128xbf16>
    %c0_34 = arith.constant 0 : index
    %c0_35 = arith.constant 0 : index
    %97 = vector.load %arg10[%c0_34, %c0_35] : memref<128x128xbf16, #tpu.memory_space<vmem>>, vector<128x128xbf16>
    %cst_36 = arith.constant dense<0.000000e+00> : vector<16x128xf32>
    %98 = tpu.matmul %96, %97, %cst_36 {dimension_numbers = #tpu.dot_dimension_numbers<[1], [0], [0], [1], [0, 0, 1, 1], [], []>} : vector<16x128xbf16>, vector<128x128xbf16>, vector<16x128xf32> -> vector<16x128xf32>
    %c0_37 = arith.constant 0 : index
    %c0_38 = arith.constant 0 : index
    %99 = vector.load %arg11[%c0_37, %c0_38] : memref<1x128xf32, #tpu.memory_space<vmem>>, vector<1x128xf32>
    %100 = vector.broadcast %99 : vector<1x128xf32> to vector<16x128xf32>
    %101 = arith.addf %98, %100 : vector<16x128xf32>
    %102 = arith.truncf %3 : vector<16x128xf32> to vector<16x128xbf16>
    %c0_39 = arith.constant 0 : index
    %c0_40 = arith.constant 0 : index
    %103 = vector.load %arg12[%c0_39, %c0_40] : memref<128x256xbf16, #tpu.memory_space<vmem>>, vector<128x256xbf16>
    %cst_41 = arith.constant dense<0.000000e+00> : vector<16x256xf32>
    %104 = tpu.matmul %102, %103, %cst_41 {dimension_numbers = #tpu.dot_dimension_numbers<[1], [0], [0], [1], [0, 0, 1, 1], [], []>} : vector<16x128xbf16>, vector<128x256xbf16>, vector<16x256xf32> -> vector<16x256xf32>
    %c0_42 = arith.constant 0 : index
    %c0_43 = arith.constant 0 : index
    %105 = vector.load %arg13[%c0_42, %c0_43] : memref<1x256xf32, #tpu.memory_space<vmem>>, vector<1x256xf32>
    %106 = vector.broadcast %105 : vector<1x256xf32> to vector<16x256xf32>
    %107 = arith.addf %104, %106 : vector<16x256xf32>
    %108 = vector.extract_strided_slice %107 {offsets = [0, 0], sizes = [16, 128], strides = [1, 1]} : vector<16x256xf32> to vector<16x128xf32>
    %109 = vector.extract_strided_slice %107 {offsets = [0, 128], sizes = [16, 128], strides = [1, 1]} : vector<16x256xf32> to vector<16x128xf32>
    %c0_44 = arith.constant 0 : index
    %c0_45 = arith.constant 0 : index
    %c0_46 = arith.constant 0 : index
    %110 = vector.load %arg4[%c0_44, %c0_45, %c0_46] : memref<2x1x8xf32, #tpu.memory_space<vmem>>, vector<2x1x8xf32>
    %111 = vector.shape_cast %101 : vector<16x128xf32> to vector<2x8x128xf32>
    %112 = vector.shape_cast %108 : vector<16x128xf32> to vector<2x8x128xf32>
    %113 = vector.shape_cast %109 : vector<16x128xf32> to vector<2x8x128xf32>
    %114 = vector.extract_strided_slice %111 {offsets = [0, 0, 0], sizes = [2, 8, 32], strides = [1, 1, 1]} : vector<2x8x128xf32> to vector<2x8x32xf32>
    %115 = vector.extract_strided_slice %111 {offsets = [0, 0, 32], sizes = [2, 8, 32], strides = [1, 1, 1]} : vector<2x8x128xf32> to vector<2x8x32xf32>
    %116 = vector.extract_strided_slice %111 {offsets = [0, 0, 64], sizes = [2, 8, 32], strides = [1, 1, 1]} : vector<2x8x128xf32> to vector<2x8x32xf32>
    %117 = vector.extract_strided_slice %111 {offsets = [0, 0, 96], sizes = [2, 8, 32], strides = [1, 1, 1]} : vector<2x8x128xf32> to vector<2x8x32xf32>
    %118 = tpu.concatenate %114, %115, %116, %117 in 0 : vector<2x8x32xf32>, vector<2x8x32xf32>, vector<2x8x32xf32>, vector<2x8x32xf32> -> vector<8x8x32xf32>
    %119 = arith.truncf %118 : vector<8x8x32xf32> to vector<8x8x32xbf16>
    %120 = vector.extract_strided_slice %112 {offsets = [0, 0, 0], sizes = [2, 8, 32], strides = [1, 1, 1]} : vector<2x8x128xf32> to vector<2x8x32xf32>
    %121 = vector.extract_strided_slice %112 {offsets = [0, 0, 32], sizes = [2, 8, 32], strides = [1, 1, 1]} : vector<2x8x128xf32> to vector<2x8x32xf32>
    %122 = vector.extract_strided_slice %112 {offsets = [0, 0, 64], sizes = [2, 8, 32], strides = [1, 1, 1]} : vector<2x8x128xf32> to vector<2x8x32xf32>
    %123 = vector.extract_strided_slice %112 {offsets = [0, 0, 96], sizes = [2, 8, 32], strides = [1, 1, 1]} : vector<2x8x128xf32> to vector<2x8x32xf32>
    %124 = tpu.concatenate %120, %121, %122, %123 in 0 : vector<2x8x32xf32>, vector<2x8x32xf32>, vector<2x8x32xf32>, vector<2x8x32xf32> -> vector<8x8x32xf32>
    %125 = arith.truncf %124 : vector<8x8x32xf32> to vector<8x8x32xbf16>
    %126 = vector.extract_strided_slice %113 {offsets = [0, 0, 0], sizes = [2, 8, 32], strides = [1, 1, 1]} : vector<2x8x128xf32> to vector<2x8x32xf32>
    %127 = vector.extract_strided_slice %113 {offsets = [0, 0, 32], sizes = [2, 8, 32], strides = [1, 1, 1]} : vector<2x8x128xf32> to vector<2x8x32xf32>
    %128 = vector.extract_strided_slice %113 {offsets = [0, 0, 64], sizes = [2, 8, 32], strides = [1, 1, 1]} : vector<2x8x128xf32> to vector<2x8x32xf32>
    %129 = vector.extract_strided_slice %113 {offsets = [0, 0, 96], sizes = [2, 8, 32], strides = [1, 1, 1]} : vector<2x8x128xf32> to vector<2x8x32xf32>
    %130 = tpu.concatenate %126, %127, %128, %129 in 0 : vector<2x8x32xf32>, vector<2x8x32xf32>, vector<2x8x32xf32>, vector<2x8x32xf32> -> vector<8x8x32xf32>
    %131 = arith.truncf %130 : vector<8x8x32xf32> to vector<8x8x32xbf16>
    "tpu.trace_start"() <{level = 10 : i32, message = "bqd,bkd->bqk"}> : () -> ()
    %cst_47 = arith.constant dense<0.000000e+00> : vector<8x8x8xf32>
    %132 = tpu.matmul %119, %125, %cst_47 {dimension_numbers = #tpu.dot_dimension_numbers<[2], [2], [1], [1], [0, 0, 0, 1, 1, 1], [0], [0]>} : vector<8x8x32xbf16>, vector<8x8x32xbf16>, vector<8x8x8xf32> -> vector<8x8x8xf32>
    "tpu.trace_stop"() : () -> ()
    %cst_48 = arith.constant 0.176776692 : f32
    %133 = vector.broadcast %cst_48 : f32 to vector<8x8x8xf32>
    %134 = arith.mulf %132, %133 : vector<8x8x8xf32>
    %135 = tpu.concatenate %110, %110, %110, %110 in 0 : vector<2x1x8xf32>, vector<2x1x8xf32>, vector<2x1x8xf32>, vector<2x1x8xf32> -> vector<8x1x8xf32>
    %136 = vector.broadcast %135 : vector<8x1x8xf32> to vector<8x8x8xf32>
    %137 = arith.addf %134, %136 : vector<8x8x8xf32>
    %cst_49 = arith.constant dense<0xFF800000> : vector<8x8xf32>
    %138 = vector.multi_reduction <maximumf>, %137, %cst_49 [2] : vector<8x8x8xf32> to vector<8x8xf32>
    %139 = vector.shape_cast %138 : vector<8x8xf32> to vector<8x8x1xf32>
    %140 = vector.broadcast %139 : vector<8x8x1xf32> to vector<8x8x8xf32>
    %141 = arith.subf %137, %140 : vector<8x8x8xf32>
    %142 = math.exp %141 : vector<8x8x8xf32>
    %cst_50 = arith.constant dense<0.000000e+00> : vector<8x8xf32>
    %143 = vector.multi_reduction <add>, %142, %cst_50 [2] : vector<8x8x8xf32> to vector<8x8xf32>
    %144 = vector.shape_cast %143 : vector<8x8xf32> to vector<8x8x1xf32>
    %145 = tpu.reciprocal %144 {approx = true} : vector<8x8x1xf32> -> vector<8x8x1xf32>
    %146 = vector.broadcast %145 : vector<8x8x1xf32> to vector<8x8x8xf32>
    %147 = arith.mulf %142, %146 : vector<8x8x8xf32>
    %148 = arith.truncf %147 : vector<8x8x8xf32> to vector<8x8x8xbf16>
    "tpu.trace_start"() <{level = 10 : i32, message = "bqk,bkd->bqd"}> : () -> ()
    %cst_51 = arith.constant dense<0.000000e+00> : vector<8x8x32xf32>
    %149 = tpu.matmul %148, %131, %cst_51 {dimension_numbers = #tpu.dot_dimension_numbers<[2], [1], [1], [2], [0, 0, 0, 1, 1, 2], [0], [0]>} : vector<8x8x8xbf16>, vector<8x8x32xbf16>, vector<8x8x32xf32> -> vector<8x8x32xf32>
    "tpu.trace_stop"() : () -> ()
    %150 = vector.extract_strided_slice %149 {offsets = [0, 0, 0], sizes = [2, 8, 32], strides = [1, 1, 1]} : vector<8x8x32xf32> to vector<2x8x32xf32>
    %151 = vector.extract_strided_slice %149 {offsets = [2, 0, 0], sizes = [2, 8, 32], strides = [1, 1, 1]} : vector<8x8x32xf32> to vector<2x8x32xf32>
    %152 = vector.extract_strided_slice %149 {offsets = [4, 0, 0], sizes = [2, 8, 32], strides = [1, 1, 1]} : vector<8x8x32xf32> to vector<2x8x32xf32>
    %153 = vector.extract_strided_slice %149 {offsets = [6, 0, 0], sizes = [2, 8, 32], strides = [1, 1, 1]} : vector<8x8x32xf32> to vector<2x8x32xf32>
    %154 = tpu.concatenate %150, %151, %152, %153 in 2 : vector<2x8x32xf32>, vector<2x8x32xf32>, vector<2x8x32xf32>, vector<2x8x32xf32> -> vector<2x8x128xf32>
    %155 = vector.shape_cast %154 : vector<2x8x128xf32> to vector<16x128xf32>
    %156 = arith.truncf %155 : vector<16x128xf32> to vector<16x128xbf16>
    %c0_52 = arith.constant 0 : index
    %c0_53 = arith.constant 0 : index
    %157 = vector.load %arg14[%c0_52, %c0_53] : memref<128x128xbf16, #tpu.memory_space<vmem>>, vector<128x128xbf16>
    %cst_54 = arith.constant dense<0.000000e+00> : vector<16x128xf32>
    %158 = tpu.matmul %156, %157, %cst_54 {dimension_numbers = #tpu.dot_dimension_numbers<[1], [0], [0], [1], [0, 0, 1, 1], [], []>} : vector<16x128xbf16>, vector<128x128xbf16>, vector<16x128xf32> -> vector<16x128xf32>
    %c0_55 = arith.constant 0 : index
    %c0_56 = arith.constant 0 : index
    %159 = vector.load %arg15[%c0_55, %c0_56] : memref<1x128xf32, #tpu.memory_space<vmem>>, vector<1x128xf32>
    %160 = vector.broadcast %159 : vector<1x128xf32> to vector<16x128xf32>
    %161 = arith.addf %158, %160 : vector<16x128xf32>
    %162 = arith.addf %161, %95 : vector<16x128xf32>
    %c0_57 = arith.constant 0 : index
    %c0_58 = arith.constant 0 : index
    %163 = vector.load %arg16[%c0_57, %c0_58] : memref<1x128xf32, #tpu.memory_space<vmem>>, vector<1x128xf32>
    %c0_59 = arith.constant 0 : index
    %c0_60 = arith.constant 0 : index
    %164 = vector.load %arg17[%c0_59, %c0_60] : memref<1x128xf32, #tpu.memory_space<vmem>>, vector<1x128xf32>
    %cst_61 = arith.constant dense<0.000000e+00> : vector<16xf32>
    %165 = vector.multi_reduction <add>, %162, %cst_61 [1] : vector<16x128xf32> to vector<16xf32>
    %166 = vector.shape_cast %165 : vector<16xf32> to vector<16x1xf32>
    %cst_62 = arith.constant 1.280000e+02 : f32
    %167 = vector.broadcast %cst_62 : f32 to vector<16x1xf32>
    %168 = arith.divf %166, %167 : vector<16x1xf32>
    %169 = arith.mulf %162, %162 : vector<16x128xf32>
    %cst_63 = arith.constant dense<0.000000e+00> : vector<16xf32>
    %170 = vector.multi_reduction <add>, %169, %cst_63 [1] : vector<16x128xf32> to vector<16xf32>
    %171 = vector.shape_cast %170 : vector<16xf32> to vector<16x1xf32>
    %cst_64 = arith.constant 1.280000e+02 : f32
    %172 = vector.broadcast %cst_64 : f32 to vector<16x1xf32>
    %173 = arith.divf %171, %172 : vector<16x1xf32>
    %174 = arith.mulf %168, %168 : vector<16x1xf32>
    %175 = arith.subf %173, %174 : vector<16x1xf32>
    %cst_65 = arith.constant 0.000000e+00 : f32
    %176 = vector.broadcast %cst_65 : f32 to vector<16x1xf32>
    %177 = arith.maximumf %175, %176 : vector<16x1xf32>
    %178 = vector.broadcast %168 : vector<16x1xf32> to vector<16x128xf32>
    %179 = arith.subf %162, %178 : vector<16x128xf32>
    %cst_66 = arith.constant 9.99999974E-6 : f32
    %180 = vector.broadcast %cst_66 : f32 to vector<16x1xf32>
    %181 = arith.addf %177, %180 : vector<16x1xf32>
    %182 = math.rsqrt %181 : vector<16x1xf32>
    %183 = vector.broadcast %182 : vector<16x1xf32> to vector<16x128xf32>
    %184 = arith.mulf %179, %183 : vector<16x128xf32>
    %185 = vector.broadcast %163 : vector<1x128xf32> to vector<16x128xf32>
    %186 = arith.mulf %184, %185 : vector<16x128xf32>
    %187 = vector.broadcast %164 : vector<1x128xf32> to vector<16x128xf32>
    %188 = arith.addf %186, %187 : vector<16x128xf32>
    %189 = arith.truncf %188 : vector<16x128xf32> to vector<16x128xbf16>
    %c0_67 = arith.constant 0 : index
    %c0_68 = arith.constant 0 : index
    %190 = vector.load %arg18[%c0_67, %c0_68] : memref<128x256xbf16, #tpu.memory_space<vmem>>, vector<128x256xbf16>
    %cst_69 = arith.constant dense<0.000000e+00> : vector<16x256xf32>
    %191 = tpu.matmul %189, %190, %cst_69 {dimension_numbers = #tpu.dot_dimension_numbers<[1], [0], [0], [1], [0, 0, 1, 1], [], []>} : vector<16x128xbf16>, vector<128x256xbf16>, vector<16x256xf32> -> vector<16x256xf32>
    %c0_70 = arith.constant 0 : index
    %c0_71 = arith.constant 0 : index
    %192 = vector.load %arg19[%c0_70, %c0_71] : memref<1x256xf32, #tpu.memory_space<vmem>>, vector<1x256xf32>
    %193 = vector.broadcast %192 : vector<1x256xf32> to vector<16x256xf32>
    %194 = arith.addf %191, %193 : vector<16x256xf32>
    %cst_72 = arith.constant 0.000000e+00 : f32
    %195 = vector.broadcast %cst_72 : f32 to vector<16x256xf32>
    %196 = arith.maximumf %194, %195 : vector<16x256xf32>
    %c0_73 = arith.constant 0 : index
    %c0_74 = arith.constant 0 : index
    %197 = vector.load %arg20[%c0_73, %c0_74] : memref<1x256xf32, #tpu.memory_space<vmem>>, vector<1x256xf32>
    %c0_75 = arith.constant 0 : index
    %c0_76 = arith.constant 0 : index
    %198 = vector.load %arg21[%c0_75, %c0_76] : memref<1x256xf32, #tpu.memory_space<vmem>>, vector<1x256xf32>
    %cst_77 = arith.constant dense<0.000000e+00> : vector<16xf32>
    %199 = vector.multi_reduction <add>, %196, %cst_77 [1] : vector<16x256xf32> to vector<16xf32>
    %200 = vector.shape_cast %199 : vector<16xf32> to vector<16x1xf32>
    %cst_78 = arith.constant 2.560000e+02 : f32
    %201 = vector.broadcast %cst_78 : f32 to vector<16x1xf32>
    %202 = arith.divf %200, %201 : vector<16x1xf32>
    %203 = arith.mulf %196, %196 : vector<16x256xf32>
    %cst_79 = arith.constant dense<0.000000e+00> : vector<16xf32>
    %204 = vector.multi_reduction <add>, %203, %cst_79 [1] : vector<16x256xf32> to vector<16xf32>
    %205 = vector.shape_cast %204 : vector<16xf32> to vector<16x1xf32>
    %cst_80 = arith.constant 2.560000e+02 : f32
    %206 = vector.broadcast %cst_80 : f32 to vector<16x1xf32>
    %207 = arith.divf %205, %206 : vector<16x1xf32>
    %208 = arith.mulf %202, %202 : vector<16x1xf32>
    %209 = arith.subf %207, %208 : vector<16x1xf32>
    %cst_81 = arith.constant 0.000000e+00 : f32
    %210 = vector.broadcast %cst_81 : f32 to vector<16x1xf32>
    %211 = arith.maximumf %209, %210 : vector<16x1xf32>
    %212 = vector.broadcast %202 : vector<16x1xf32> to vector<16x256xf32>
    %213 = arith.subf %196, %212 : vector<16x256xf32>
    %cst_82 = arith.constant 9.99999974E-6 : f32
    %214 = vector.broadcast %cst_82 : f32 to vector<16x1xf32>
    %215 = arith.addf %211, %214 : vector<16x1xf32>
    %216 = math.rsqrt %215 : vector<16x1xf32>
    %217 = vector.broadcast %216 : vector<16x1xf32> to vector<16x256xf32>
    %218 = arith.mulf %213, %217 : vector<16x256xf32>
    %219 = vector.broadcast %197 : vector<1x256xf32> to vector<16x256xf32>
    %220 = arith.mulf %218, %219 : vector<16x256xf32>
    %221 = vector.broadcast %198 : vector<1x256xf32> to vector<16x256xf32>
    %222 = arith.addf %220, %221 : vector<16x256xf32>
    %223 = arith.truncf %222 : vector<16x256xf32> to vector<16x256xbf16>
    %c0_83 = arith.constant 0 : index
    %c0_84 = arith.constant 0 : index
    %224 = vector.load %arg5[%c0_83, %c0_84] : memref<16x256xbf16, #tpu.memory_space<vmem>>, vector<16x256xbf16>
    %225 = arith.mulf %223, %224 : vector<16x256xbf16>
    %c0_85 = arith.constant 0 : index
    %c0_86 = arith.constant 0 : index
    %226 = vector.load %arg22[%c0_85, %c0_86] : memref<256x128xbf16, #tpu.memory_space<vmem>>, vector<256x128xbf16>
    %cst_87 = arith.constant dense<0.000000e+00> : vector<16x128xf32>
    %227 = tpu.matmul %225, %226, %cst_87 {dimension_numbers = #tpu.dot_dimension_numbers<[1], [0], [0], [1], [0, 0, 1, 1], [], []>} : vector<16x256xbf16>, vector<256x128xbf16>, vector<16x128xf32> -> vector<16x128xf32>
    %c0_88 = arith.constant 0 : index
    %c0_89 = arith.constant 0 : index
    %228 = vector.load %arg23[%c0_88, %c0_89] : memref<1x128xf32, #tpu.memory_space<vmem>>, vector<1x128xf32>
    %229 = vector.broadcast %228 : vector<1x128xf32> to vector<16x128xf32>
    %230 = arith.addf %227, %229 : vector<16x128xf32>
    %231 = arith.addf %230, %188 : vector<16x128xf32>
    %c0_90 = arith.constant 0 : index
    %c0_91 = arith.constant 0 : index
    %232 = vector.load %arg24[%c0_90, %c0_91] : memref<1x128xf32, #tpu.memory_space<vmem>>, vector<1x128xf32>
    %c0_92 = arith.constant 0 : index
    %c0_93 = arith.constant 0 : index
    %233 = vector.load %arg25[%c0_92, %c0_93] : memref<1x128xf32, #tpu.memory_space<vmem>>, vector<1x128xf32>
    %cst_94 = arith.constant dense<0.000000e+00> : vector<16xf32>
    %234 = vector.multi_reduction <add>, %231, %cst_94 [1] : vector<16x128xf32> to vector<16xf32>
    %235 = vector.shape_cast %234 : vector<16xf32> to vector<16x1xf32>
    %cst_95 = arith.constant 1.280000e+02 : f32
    %236 = vector.broadcast %cst_95 : f32 to vector<16x1xf32>
    %237 = arith.divf %235, %236 : vector<16x1xf32>
    %238 = arith.mulf %231, %231 : vector<16x128xf32>
    %cst_96 = arith.constant dense<0.000000e+00> : vector<16xf32>
    %239 = vector.multi_reduction <add>, %238, %cst_96 [1] : vector<16x128xf32> to vector<16xf32>
    %240 = vector.shape_cast %239 : vector<16xf32> to vector<16x1xf32>
    %cst_97 = arith.constant 1.280000e+02 : f32
    %241 = vector.broadcast %cst_97 : f32 to vector<16x1xf32>
    %242 = arith.divf %240, %241 : vector<16x1xf32>
    %243 = arith.mulf %237, %237 : vector<16x1xf32>
    %244 = arith.subf %242, %243 : vector<16x1xf32>
    %cst_98 = arith.constant 0.000000e+00 : f32
    %245 = vector.broadcast %cst_98 : f32 to vector<16x1xf32>
    %246 = arith.maximumf %244, %245 : vector<16x1xf32>
    %247 = vector.broadcast %237 : vector<16x1xf32> to vector<16x128xf32>
    %248 = arith.subf %231, %247 : vector<16x128xf32>
    %cst_99 = arith.constant 9.99999974E-6 : f32
    %249 = vector.broadcast %cst_99 : f32 to vector<16x1xf32>
    %250 = arith.addf %246, %249 : vector<16x1xf32>
    %251 = math.rsqrt %250 : vector<16x1xf32>
    %252 = vector.broadcast %251 : vector<16x1xf32> to vector<16x128xf32>
    %253 = arith.mulf %248, %252 : vector<16x128xf32>
    %254 = vector.broadcast %232 : vector<1x128xf32> to vector<16x128xf32>
    %255 = arith.mulf %253, %254 : vector<16x128xf32>
    %256 = vector.broadcast %233 : vector<1x128xf32> to vector<16x128xf32>
    %257 = arith.addf %255, %256 : vector<16x128xf32>
    %258 = vector.shape_cast %257 : vector<16x128xf32> to vector<2x8x128xf32>
    %c0_100 = arith.constant 0 : index
    %c0_101 = arith.constant 0 : index
    %c0_102 = arith.constant 0 : index
    %259 = vector.load %arg26[%c0_100, %c0_101, %c0_102] : memref<2x8x128xf32, #tpu.memory_space<vmem>>, vector<2x8x128xf32>
    tpu.vector_store %arg26[%c0_100, %c0_101, %c0_102], %258 {strides = array<i32>} : memref<2x8x128xf32, #tpu.memory_space<vmem>>, vector<2x8x128xf32>,
    return
  }
}

</mosaic_0001>

<llo_original>
// kernel: tpu_custom_call.1
$region0: #{tpu_custom_call.1}
  #allocation0 [shape = 'u32[]', space=smem, size = 0x4, offset = 0x4, fixed_abs, tag = 'smem constant byte address 0x4 - core index']
  #allocation1 [shape = 'u32[72,128]{1,0:T(1,128)}', space=vmem, size = 0x9000, scoped, tag = 'internal scratch']
  %s0 = inlined_call_operand.hbm [shape: f32[2,8,128], index: 0, kind: input, shape index: {}]
  %s1 = inlined_call_operand.hbm [shape: f32[2,8,128], index: 1, kind: input, shape index: {}]
  %s2 = inlined_call_operand.hbm [shape: f32[8,8], index: 2, kind: input, shape index: {}]
  %s3 = inlined_call_operand.vmem [shape: f32[2,1,8], index: 3, kind: input, shape index: {}]
  %s4 = inlined_call_operand.hbm [shape: f32[2,1,8], index: 4, kind: input, shape index: {}]
  %s5 = inlined_call_operand.hbm [shape: bf16[16,256], index: 5, kind: input, shape index: {}]
  %s6 = inlined_call_operand.hbm [shape: bf16[128,384], index: 6, kind: input, shape index: {}]
  %s7 = inlined_call_operand.vmem [shape: f32[1,384], index: 7, kind: input, shape index: {}]
  %s8 = inlined_call_operand.hbm [shape: bf16[128,128], index: 8, kind: input, shape index: {}]
  %s9 = inlined_call_operand.hbm [shape: f32[1,128], index: 9, kind: input, shape index: {}]
  %s10 = inlined_call_operand.hbm [shape: bf16[128,128], index: 10, kind: input, shape index: {}]
  %s11 = inlined_call_operand.hbm [shape: f32[1,128], index: 11, kind: input, shape index: {}]
  %s12 = inlined_call_operand.hbm [shape: bf16[128,256], index: 12, kind: input, shape index: {}]
  %s13 = inlined_call_operand.vmem [shape: f32[1,256], index: 13, kind: input, shape index: {}]
  %s14 = inlined_call_operand.hbm [shape: bf16[128,128], index: 14, kind: input, shape index: {}]
  %s15 = inlined_call_operand.vmem [shape: f32[1,128], index: 15, kind: input, shape index: {}]
  %s16 = inlined_call_operand.vmem [shape: f32[1,128], index: 16, kind: input, shape index: {}]
  %s17 = inlined_call_operand.vmem [shape: f32[1,128], index: 17, kind: input, shape index: {}]
  %s18 = inlined_call_operand.hbm [shape: bf16[128,256], index: 18, kind: input, shape index: {}]
  %s19 = inlined_call_operand.vmem [shape: f32[1,256], index: 19, kind: input, shape index: {}]
  %s20 = inlined_call_operand.vmem [shape: f32[1,256], index: 20, kind: input, shape index: {}]
  %s21 = inlined_call_operand.vmem [shape: f32[1,256], index: 21, kind: input, shape index: {}]
  %s22 = inlined_call_operand.hbm [shape: bf16[256,128], index: 22, kind: input, shape index: {}]
  %s23 = inlined_call_operand.vmem [shape: f32[1,128], index: 23, kind: input, shape index: {}]
  %s24 = inlined_call_operand.vmem [shape: f32[1,128], index: 24, kind: input, shape index: {}]
  %s25 = inlined_call_operand.vmem [shape: f32[1,128], index: 25, kind: input, shape index: {}]
  %s26 = inlined_call_operand.hbm [shape: f32[2,8,128], index: 26, kind: output, shape index: {}]
  %s27 = sld [smem:[#allocation0]]
  $region170: #{tpu_custom_call.1} parent=0
    _
  %s29 = ssub.s32 1, %s27
  %s30 = scalar_select 0, %s29, %s27
  $region1: #{tpu_custom_call.1} parent=0
    #allocation2 [shape = 'u8[8192]{0}', space=vmem, size = 0x2000, scoped, tag = 'input window, operand 0, single buffered']
    #allocation3 [shape = 's32[1]{0}', space=sflag, size = 0x4, scoped, tag = 'scoped memory for tpu_custom_call.1']
    #allocation4 [shape = 's32[1]{0}', space=sflag, size = 0x4, scoped, tag = 'scoped memory for tpu_custom_call.1']
    #allocation5 [shape = 'u8[8192]{0}', space=vmem, size = 0x2000, scoped, tag = 'input window, operand 1, single buffered']
    #allocation6 [shape = 's32[1]{0}', space=sflag, size = 0x4, scoped, tag = 'scoped memory for tpu_custom_call.1']
    #allocation7 [shape = 'u8[4096]{0}', space=vmem, size = 0x1000, scoped, tag = 'input window, operand 2, single buffered']
    #allocation8 [shape = 'u8[1024]{0}', space=vmem, size = 0x400, scoped, tag = 'input window, operand 4, single buffered']
    #allocation9 [shape = 's32[1]{0}', space=sflag, size = 0x4, scoped, tag = 'scoped memory for tpu_custom_call.1']
    #allocation10 [shape = 'u8[8192]{0}', space=vmem, size = 0x2000, scoped, tag = 'input window, operand 5, single buffered']
    #allocation11 [shape = 'u8[98304]{0}', space=vmem, size = 0x18000, scoped, tag = 'input window, operand 6, single buffered']
    #allocation12 [shape = 's32[1]{0}', space=sflag, size = 0x4, scoped, tag = 'scoped memory for tpu_custom_call.1']
    #allocation13 [shape = 'u8[32768]{0}', space=vmem, size = 0x8000, scoped, tag = 'input window, operand 8, single buffered']
    #allocation14 [shape = 'u8[512]{0}', space=vmem, size = 0x400, scoped, tag = 'input window, operand 9, single buffered']
    #allocation15 [shape = 's32[1]{0}', space=sflag, size = 0x4, scoped, tag = 'scoped memory for tpu_custom_call.1']
    #allocation16 [shape = 'u8[32768]{0}', space=vmem, size = 0x8000, scoped, tag = 'input window, operand 10, single buffered']
    #allocation17 [shape = 'u8[512]{0}', space=vmem, size = 0x400, scoped, tag = 'input window, operand 11, single buffered']
    #allocation18 [shape = 's32[1]{0}', space=sflag, size = 0x4, scoped, tag = 'scoped memory for tpu_custom_call.1']
    #allocation19 [shape = 'u8[65536]{0}', space=vmem, size = 0x10000, scoped, tag = 'input window, operand 12, single buffered']
    #allocation20 [shape = 'u8[32768]{0}', space=vmem, size = 0x8000, scoped, tag = 'input window, operand 14, single buffered']
    #allocation21 [shape = 's32[1]{0}', space=sflag, size = 0x4, scoped, tag = 'scoped memory for tpu_custom_call.1']
    #allocation22 [shape = 'u8[65536]{0}', space=vmem, size = 0x10000, scoped, tag = 'input window, operand 18, single buffered']
    #allocation23 [shape = 'u8[65536]{0}', space=vmem, size = 0x10000, scoped, tag = 'input window, operand 22, single buffered']
    #allocation24 [shape = 's32[1]{0}', space=sflag, size = 0x4, scoped, tag = 'scoped memory for tpu_custom_call.1']
    #allocation25 [shape = 'u8[8192]{0}', space=vmem, size = 0x2000, scoped, tag = 'output window, operand 0, single buffered']
    %31 = vsyncpa [#allocation3], 0
    %32 = vsyncpa [#allocation6], 0
    %33 = vsyncpa [#allocation9], 0
    %34 = vsyncpa [#allocation12], 0
    %35 = vsyncpa [#allocation15], 0
    %36 = vsyncpa [#allocation18], 0
    %37 = vsyncpa [#allocation21], 0
    %38 = vsyncpa [#allocation24], 0
    %39 = vsyncpa [#allocation4], 0
    // Predicated region
    $region2: #{tpu_custom_call.1} parent=1 // pred_check
      _
    $region3: #{tpu_custom_call.1} parent=1 // pred_check_branch
      %41 = sbr.rel (0) target = $region5
    $region4: #{tpu_custom_call.1} parent=1 // pred_region
      %43 = vsyncadd [#allocation3], 0
      %s44 = sshll.u32 %s0, 4
      %s45 = int_to_ptr.hbm [resolvable:$true] %s44
      %s46 = sshll.u32 [#allocation2], 4
      %s47 = int_to_ptr.vmem [resolvable:$true] %s46
      %52 = dma.hbm_to_vmem [thread:$0]  %s45, 256, %s47, [#allocation3], 128, 128, 8
    $region5: #{tpu_custom_call.1} parent=1 // pred_fallthru
      _
    // Predicated region
    $region6: #{tpu_custom_call.1} parent=1 // pred_check
      _
    $region7: #{tpu_custom_call.1} parent=1 // pred_check_branch
      %54 = sbr.rel (0) target = $region9
    $region8: #{tpu_custom_call.1} parent=1 // pred_region
      %56 = vsyncadd [#allocation6], 0
      %s57 = sshll.u32 %s1, 4
      %s58 = int_to_ptr.hbm [resolvable:$true] %s57
      %s59 = sshll.u32 [#allocation5], 4
      %s60 = int_to_ptr.vmem [resolvable:$true] %s59
      %65 = dma.hbm_to_vmem [thread:$0]  %s58, 256, %s60, [#allocation6], 128, 128, 8
    $region9: #{tpu_custom_call.1} parent=1 // pred_fallthru
      _
    // Predicated region
    $region10: #{tpu_custom_call.1} parent=1 // pred_check
      _
    $region11: #{tpu_custom_call.1} parent=1 // pred_check_branch
      %67 = sbr.rel (0) target = $region13
    $region12: #{tpu_custom_call.1} parent=1 // pred_region
      %69 = vsyncadd [#allocation6], 0
      %s71 = sshll.u32 %s2, 4
      %s72 = int_to_ptr.hbm [resolvable:$true] %s71
      %s73 = sshll.u32 [#allocation7], 4
      %s74 = int_to_ptr.vmem [resolvable:$true] %s73
      %76 = dma.hbm_to_vmem [thread:$0]  %s72, 128, %s74, [#allocation6]
    $region13: #{tpu_custom_call.1} parent=1 // pred_fallthru
      _
    // Predicated region
    $region14: #{tpu_custom_call.1} parent=1 // pred_check
      _
    $region15: #{tpu_custom_call.1} parent=1 // pred_check_branch
      %78 = sbr.rel (0) target = $region17
    $region16: #{tpu_custom_call.1} parent=1 // pred_region
      _
    $region17: #{tpu_custom_call.1} parent=1 // pred_fallthru
      _
    // Predicated region
    $region18: #{tpu_custom_call.1} parent=1 // pred_check
      _
    $region19: #{tpu_custom_call.1} parent=1 // pred_check_branch
      %80 = sbr.rel (0) target = $region21
    $region20: #{tpu_custom_call.1} parent=1 // pred_region
      %82 = vsyncadd [#allocation9], 0
      %s83 = sshll.u32 %s4, 4
      %s84 = int_to_ptr.hbm [resolvable:$true] %s83
      %s85 = sshll.u32 [#allocation8], 4
      %s86 = int_to_ptr.vmem [resolvable:$true] %s85
      %91 = dma.hbm_to_vmem [thread:$0]  %s84, 32, %s86, [#allocation9], 16, 16, 1
    $region21: #{tpu_custom_call.1} parent=1 // pred_fallthru
      _
    // Predicated region
    $region22: #{tpu_custom_call.1} parent=1 // pred_check
      _
    $region23: #{tpu_custom_call.1} parent=1 // pred_check_branch
      %93 = sbr.rel (0) target = $region25
    $region24: #{tpu_custom_call.1} parent=1 // pred_region
      %95 = vsyncadd [#allocation9], 0
      %s96 = sshll.u32 %s5, 4
      %s97 = int_to_ptr.hbm [resolvable:$true] %s96
      %s98 = sshll.u32 [#allocation10], 4
      %s99 = int_to_ptr.vmem [resolvable:$true] %s98
      %104 = dma.hbm_to_vmem [thread:$0]  %s97, 256, %s99, [#allocation9], 128, 128, 8
    $region25: #{tpu_custom_call.1} parent=1 // pred_fallthru
      _
    // Predicated region
    $region26: #{tpu_custom_call.1} parent=1 // pred_check
      _
    $region27: #{tpu_custom_call.1} parent=1 // pred_check_branch
      %106 = sbr.rel (0) target = $region29
    $region28: #{tpu_custom_call.1} parent=1 // pred_region
      %108 = vsyncadd [#allocation12], 0
      %s109 = sshll.u32 %s6, 4
      %s110 = int_to_ptr.hbm [resolvable:$true] %s109
      %s111 = sshll.u32 [#allocation11], 4
      %s112 = int_to_ptr.vmem [resolvable:$true] %s111
      %117 = dma.hbm_to_vmem [thread:$0]  %s110, 3072, %s112, [#allocation12], 192, 192, 12
    $region29: #{tpu_custom_call.1} parent=1 // pred_fallthru
      _
    // Predicated region
    $region30: #{tpu_custom_call.1} parent=1 // pred_check
      _
    $region31: #{tpu_custom_call.1} parent=1 // pred_check_branch
      %119 = sbr.rel (0) target = $region33
    $region32: #{tpu_custom_call.1} parent=1 // pred_region
      _
    $region33: #{tpu_custom_call.1} parent=1 // pred_fallthru
      _
    // Predicated region
    $region34: #{tpu_custom_call.1} parent=1 // pred_check
      _
    $region35: #{tpu_custom_call.1} parent=1 // pred_check_branch
      %121 = sbr.rel (0) target = $region37
    $region36: #{tpu_custom_call.1} parent=1 // pred_region
      %123 = vsyncadd [#allocation12], 0
      %s124 = sshll.u32 %s8, 4
      %s125 = int_to_ptr.hbm [resolvable:$true] %s124
      %s126 = sshll.u32 [#allocation13], 4
      %s127 = int_to_ptr.vmem [resolvable:$true] %s126
      %132 = dma.hbm_to_vmem [thread:$0]  %s125, 1024, %s127, [#allocation12], 64, 64, 4
    $region37: #{tpu_custom_call.1} parent=1 // pred_fallthru
      _
    // Predicated region
    $region38: #{tpu_custom_call.1} parent=1 // pred_check
      _
    $region39: #{tpu_custom_call.1} parent=1 // pred_check_branch
      %134 = sbr.rel (0) target = $region41
    $region40: #{tpu_custom_call.1} parent=1 // pred_region
      %136 = vsyncadd [#allocation15], 0
      %s138 = sshll.u32 %s9, 4
      %s139 = int_to_ptr.hbm [resolvable:$true] %s138
      %s140 = sshll.u32 [#allocation14], 4
      %s141 = int_to_ptr.vmem [resolvable:$true] %s140
      %143 = dma.hbm_to_vmem [thread:$0]  %s139, 16, %s141, [#allocation15]
    $region41: #{tpu_custom_call.1} parent=1 // pred_fallthru
      _
    // Predicated region
    $region42: #{tpu_custom_call.1} parent=1 // pred_check
      _
    $region43: #{tpu_custom_call.1} parent=1 // pred_check_branch
      %145 = sbr.rel (0) target = $region45
    $region44: #{tpu_custom_call.1} parent=1 // pred_region
      %147 = vsyncadd [#allocation15], 0
      %s148 = sshll.u32 %s10, 4
      %s149 = int_to_ptr.hbm [resolvable:$true] %s148
      %s150 = sshll.u32 [#allocation16], 4
      %s151 = int_to_ptr.vmem [resolvable:$true] %s150
      %156 = dma.hbm_to_vmem [thread:$0]  %s149, 1024, %s151, [#allocation15], 64, 64, 4
    $region45: #{tpu_custom_call.1} parent=1 // pred_fallthru
      _
    // Predicated region
    $region46: #{tpu_custom_call.1} parent=1 // pred_check
      _
    $region47: #{tpu_custom_call.1} parent=1 // pred_check_branch
      %158 = sbr.rel (0) target = $region49
    $region48: #{tpu_custom_call.1} parent=1 // pred_region
      %160 = vsyncadd [#allocation18], 0
      %s162 = sshll.u32 %s11, 4
      %s163 = int_to_ptr.hbm [resolvable:$true] %s162
      %s164 = sshll.u32 [#allocation17], 4
      %s165 = int_to_ptr.vmem [resolvable:$true] %s164
      %167 = dma.hbm_to_vmem [thread:$0]  %s163, 16, %s165, [#allocation18]
    $region49: #{tpu_custom_call.1} parent=1 // pred_fallthru
      _
    // Predicated region
    $region50: #{tpu_custom_call.1} parent=1 // pred_check
      _
    $region51: #{tpu_custom_call.1} parent=1 // pred_check_branch
      %169 = sbr.rel (0) target = $region53
    $region52: #{tpu_custom_call.1} parent=1 // pred_region
      %171 = vsyncadd [#allocation18], 0
      %s172 = sshll.u32 %s12, 4
      %s173 = int_to_ptr.hbm [resolvable:$true] %s172
      %s174 = sshll.u32 [#allocation19], 4
      %s175 = int_to_ptr.vmem [resolvable:$true] %s174
      %180 = dma.hbm_to_vmem [thread:$0]  %s173, 2048, %s175, [#allocation18], 128, 128, 8
    $region53: #{tpu_custom_call.1} parent=1 // pred_fallthru
      _
    // Predicated region
    $region54: #{tpu_custom_call.1} parent=1 // pred_check
      _
    $region55: #{tpu_custom_call.1} parent=1 // pred_check_branch
      %182 = sbr.rel (0) target = $region57
    $region56: #{tpu_custom_call.1} parent=1 // pred_region
      _
    $region57: #{tpu_custom_call.1} parent=1 // pred_fallthru
      _
    // Predicated region
    $region58: #{tpu_custom_call.1} parent=1 // pred_check
      _
    $region59: #{tpu_custom_call.1} parent=1 // pred_check_branch
      %184 = sbr.rel (0) target = $region61
    $region60: #{tpu_custom_call.1} parent=1 // pred_region
      %186 = vsyncadd [#allocation21], 0
      %s187 = sshll.u32 %s14, 4
      %s188 = int_to_ptr.hbm [resolvable:$true] %s187
      %s189 = sshll.u32 [#allocation20], 4
      %s190 = int_to_ptr.vmem [resolvable:$true] %s189
      %195 = dma.hbm_to_vmem [thread:$0]  %s188, 1024, %s190, [#allocation21], 64, 64, 4
    $region61: #{tpu_custom_call.1} parent=1 // pred_fallthru
      _
    // Predicated region
    $region62: #{tpu_custom_call.1} parent=1 // pred_check
      _
    $region63: #{tpu_custom_call.1} parent=1 // pred_check_branch
      %197 = sbr.rel (0) target = $region65
    $region64: #{tpu_custom_call.1} parent=1 // pred_region
      _
    $region65: #{tpu_custom_call.1} parent=1 // pred_fallthru
      _
    // Predicated region
    $region66: #{tpu_custom_call.1} parent=1 // pred_check
      _
    $region67: #{tpu_custom_call.1} parent=1 // pred_check_branch
      %199 = sbr.rel (0) target = $region69
    $region68: #{tpu_custom_call.1} parent=1 // pred_region
      _
    $region69: #{tpu_custom_call.1} parent=1 // pred_fallthru
      _
    // Predicated region
    $region70: #{tpu_custom_call.1} parent=1 // pred_check
      _
    $region71: #{tpu_custom_call.1} parent=1 // pred_check_branch
      %201 = sbr.rel (0) target = $region73
    $region72: #{tpu_custom_call.1} parent=1 // pred_region
      _
    $region73: #{tpu_custom_call.1} parent=1 // pred_fallthru
      _
    // Predicated region
    $region74: #{tpu_custom_call.1} parent=1 // pred_check
      _
    $region75: #{tpu_custom_call.1} parent=1 // pred_check_branch
      %203 = sbr.rel (0) target = $region77
    $region76: #{tpu_custom_call.1} parent=1 // pred_region
      %205 = vsyncadd [#allocation21], 0
      %s206 = sshll.u32 %s18, 4
      %s207 = int_to_ptr.hbm [resolvable:$true] %s206
      %s208 = sshll.u32 [#allocation22], 4
      %s209 = int_to_ptr.vmem [resolvable:$true] %s208
      %214 = dma.hbm_to_vmem [thread:$0]  %s207, 2048, %s209, [#allocation21], 128, 128, 8
    $region77: #{tpu_custom_call.1} parent=1 // pred_fallthru
      _
    // Predicated region
    $region78: #{tpu_custom_call.1} parent=1 // pred_check
      _
    $region79: #{tpu_custom_call.1} parent=1 // pred_check_branch
      %216 = sbr.rel (0) target = $region81
    $region80: #{tpu_custom_call.1} parent=1 // pred_region
      _
    $region81: #{tpu_custom_call.1} parent=1 // pred_fallthru
      _
    // Predicated region
    $region82: #{tpu_custom_call.1} parent=1 // pred_check
      _
    $region83: #{tpu_custom_call.1} parent=1 // pred_check_branch
      %218 = sbr.rel (0) target = $region85
    $region84: #{tpu_custom_call.1} parent=1 // pred_region
      _
    $region85: #{tpu_custom_call.1} parent=1 // pred_fallthru
      _
    // Predicated region
    $region86: #{tpu_custom_call.1} parent=1 // pred_check
      _
    $region87: #{tpu_custom_call.1} parent=1 // pred_check_branch
      %220 = sbr.rel (0) target = $region89
    $region88: #{tpu_custom_call.1} parent=1 // pred_region
      _
    $region89: #{tpu_custom_call.1} parent=1 // pred_fallthru
      _
    // Predicated region
    $region90: #{tpu_custom_call.1} parent=1 // pred_check
      _
    $region91: #{tpu_custom_call.1} parent=1 // pred_check_branch
      %222 = sbr.rel (0) target = $region93
    $region92: #{tpu_custom_call.1} parent=1 // pred_region
      %224 = vsyncadd [#allocation24], 0
      %s225 = sshll.u32 %s22, 4
      %s226 = int_to_ptr.hbm [resolvable:$true] %s225
      %s227 = sshll.u32 [#allocation23], 4
      %s228 = int_to_ptr.vmem [resolvable:$true] %s227
      %233 = dma.hbm_to_vmem [thread:$0]  %s226, 2048, %s228, [#allocation24], 64, 64, 4
    $region93: #{tpu_custom_call.1} parent=1 // pred_fallthru
      _
    // Predicated region
    $region94: #{tpu_custom_call.1} parent=1 // pred_check
      _
    $region95: #{tpu_custom_call.1} parent=1 // pred_check_branch
      %235 = sbr.rel (0) target = $region97
    $region96: #{tpu_custom_call.1} parent=1 // pred_region
      _
    $region97: #{tpu_custom_call.1} parent=1 // pred_fallthru
      _
    // Predicated region
    $region98: #{tpu_custom_call.1} parent=1 // pred_check
      _
    $region99: #{tpu_custom_call.1} parent=1 // pred_check_branch
      %237 = sbr.rel (0) target = $region101
    $region100: #{tpu_custom_call.1} parent=1 // pred_region
      _
    $region101: #{tpu_custom_call.1} parent=1 // pred_fallthru
      _
    // Predicated region
    $region102: #{tpu_custom_call.1} parent=1 // pred_check
      _
    $region103: #{tpu_custom_call.1} parent=1 // pred_check_branch
      %239 = sbr.rel (0) target = $region105
    $region104: #{tpu_custom_call.1} parent=1 // pred_region
      _
    $region105: #{tpu_custom_call.1} parent=1 // pred_fallthru
      _
    // Predicated region
    $region106: #{tpu_custom_call.1} parent=1 // pred_check
      _
    $region107: #{tpu_custom_call.1} parent=1 // pred_check_branch
      %241 = sbr.rel (0) target = $region109
    $region108: #{tpu_custom_call.1} parent=1 // pred_region
      %243 = dma.done [#allocation3], 256
    $region109: #{tpu_custom_call.1} parent=1 // pred_fallthru
      _
    // Predicated region
    $region110: #{tpu_custom_call.1} parent=1 // pred_check
      _
    $region111: #{tpu_custom_call.1} parent=1 // pred_check_branch
      %245 = sbr.rel (0) target = $region113
    $region112: #{tpu_custom_call.1} parent=1 // pred_region
      %247 = dma.done [#allocation6], 256
    $region113: #{tpu_custom_call.1} parent=1 // pred_fallthru
      _
    // Predicated region
    $region114: #{tpu_custom_call.1} parent=1 // pred_check
      _
    $region115: #{tpu_custom_call.1} parent=1 // pred_check_branch
      %249 = sbr.rel (0) target = $region117
    $region116: #{tpu_custom_call.1} parent=1 // pred_region
      %251 = dma.done [#allocation6], 128
    $region117: #{tpu_custom_call.1} parent=1 // pred_fallthru
      _
    // Predicated region
    $region118: #{tpu_custom_call.1} parent=1 // pred_check
      _
    $region119: #{tpu_custom_call.1} parent=1 // pred_check_branch
      %253 = sbr.rel (0) target = $region121
    $region120: #{tpu_custom_call.1} parent=1 // pred_region
      %255 = dma.done [#allocation9], 32
    $region121: #{tpu_custom_call.1} parent=1 // pred_fallthru
      _
    // Predicated region
    $region122: #{tpu_custom_call.1} parent=1 // pred_check
      _
    $region123: #{tpu_custom_call.1} parent=1 // pred_check_branch
      %257 = sbr.rel (0) target = $region125
    $region124: #{tpu_custom_call.1} parent=1 // pred_region
      %259 = dma.done [#allocation9], 256
    $region125: #{tpu_custom_call.1} parent=1 // pred_fallthru
      _
    // Predicated region
    $region126: #{tpu_custom_call.1} parent=1 // pred_check
      _
    $region127: #{tpu_custom_call.1} parent=1 // pred_check_branch
      %261 = sbr.rel (0) target = $region129
    $region128: #{tpu_custom_call.1} parent=1 // pred_region
      %263 = dma.done [#allocation12], 3072
    $region129: #{tpu_custom_call.1} parent=1 // pred_fallthru
      _
    // Predicated region
    $region130: #{tpu_custom_call.1} parent=1 // pred_check
      _
    $region131: #{tpu_custom_call.1} parent=1 // pred_check_branch
      %265 = sbr.rel (0) target = $region133
    $region132: #{tpu_custom_call.1} parent=1 // pred_region
      %267 = dma.done [#allocation12], 1024
    $region133: #{tpu_custom_call.1} parent=1 // pred_fallthru
      _
    // Predicated region
    $region134: #{tpu_custom_call.1} parent=1 // pred_check
      _
    $region135: #{tpu_custom_call.1} parent=1 // pred_check_branch
      %269 = sbr.rel (0) target = $region137
    $region136: #{tpu_custom_call.1} parent=1 // pred_region
      %271 = dma.done [#allocation15], 16
    $region137: #{tpu_custom_call.1} parent=1 // pred_fallthru
      _
    // Predicated region
    $region138: #{tpu_custom_call.1} parent=1 // pred_check
      _
    $region139: #{tpu_custom_call.1} parent=1 // pred_check_branch
      %273 = sbr.rel (0) target = $region141
    $region140: #{tpu_custom_call.1} parent=1 // pred_region
      %275 = dma.done [#allocation15], 1024
    $region141: #{tpu_custom_call.1} parent=1 // pred_fallthru
      _
    // Predicated region
    $region142: #{tpu_custom_call.1} parent=1 // pred_check
      _
    $region143: #{tpu_custom_call.1} parent=1 // pred_check_branch
      %277 = sbr.rel (0) target = $region145
    $region144: #{tpu_custom_call.1} parent=1 // pred_region
      %279 = dma.done [#allocation18], 16
    $region145: #{tpu_custom_call.1} parent=1 // pred_fallthru
      _
    // Predicated region
    $region146: #{tpu_custom_call.1} parent=1 // pred_check
      _
    $region147: #{tpu_custom_call.1} parent=1 // pred_check_branch
      %281 = sbr.rel (0) target = $region149
    $region148: #{tpu_custom_call.1} parent=1 // pred_region
      %283 = dma.done [#allocation18], 2048
    $region149: #{tpu_custom_call.1} parent=1 // pred_fallthru
      _
    // Predicated region
    $region150: #{tpu_custom_call.1} parent=1 // pred_check
      _
    $region151: #{tpu_custom_call.1} parent=1 // pred_check_branch
      %285 = sbr.rel (0) target = $region153
    $region152: #{tpu_custom_call.1} parent=1 // pred_region
      %287 = dma.done [#allocation21], 1024
    $region153: #{tpu_custom_call.1} parent=1 // pred_fallthru
      _
    // Predicated region
    $region154: #{tpu_custom_call.1} parent=1 // pred_check
      _
    $region155: #{tpu_custom_call.1} parent=1 // pred_check_branch
      %289 = sbr.rel (0) target = $region157
    $region156: #{tpu_custom_call.1} parent=1 // pred_region
      %291 = dma.done [#allocation21], 2048
    $region157: #{tpu_custom_call.1} parent=1 // pred_fallthru
      _
    // Predicated region
    $region158: #{tpu_custom_call.1} parent=1 // pred_check
      _
    $region159: #{tpu_custom_call.1} parent=1 // pred_check_branch
      %293 = sbr.rel (0) target = $region161
    $region160: #{tpu_custom_call.1} parent=1 // pred_region
      %295 = dma.done [#allocation24], 2048
    $region161: #{tpu_custom_call.1} parent=1 // pred_fallthru
      _
    %v297 = vld [vmem:[#allocation2] sm:$0xff]
    %v298 = vld [vmem:[#allocation2 + $0x8] sm:$0xff]
    %v299 = vld [vmem:[#allocation5] sm:$0xff]
    %v300 = vld [vmem:[#allocation5 + $0x8] sm:$0xff]
    %v301 = vpack.c.bf16 %v298, %v297
    %v302 = vld [vmem:[#allocation11] sm:$0xff]
    %v303 = vld [vmem:[#allocation11 + $0x8] sm:$0xf]
    %v304 = vld [vmem:[#allocation11 + $0xc] sm:$0xff]
    %v305 = vld [vmem:[#allocation11 + $0x14] sm:$0xf]
    %v306 = vld [vmem:[#allocation11 + $0x18] sm:$0xff]
    %v307 = vld [vmem:[#allocation11 + $0x20] sm:$0xf]
    %v308 = vld [vmem:[#allocation11 + $0x24] sm:$0xff]
    %v309 = vld [vmem:[#allocation11 + $0x2c] sm:$0xf]
    %v310 = vld [vmem:[#allocation11 + $0x30] sm:$0xff]
    %v311 = vld [vmem:[#allocation11 + $0x38] sm:$0xf]
    %v312 = vld [vmem:[#allocation11 + $0x3c] sm:$0xff]
    %v313 = vld [vmem:[#allocation11 + $0x44] sm:$0xf]
    %v314 = vld [vmem:[#allocation11 + $0x48] sm:$0xff]
    %v315 = vld [vmem:[#allocation11 + $0x50] sm:$0xf]
    %v316 = vld [vmem:[#allocation11 + $0x54] sm:$0xff]
    %v317 = vld [vmem:[#allocation11 + $0x5c] sm:$0xf]
    %v318 = vld [vmem:[#allocation11 + $0x60] sm:$0xff]
    %v319 = vld [vmem:[#allocation11 + $0x68] sm:$0xf]
    %v320 = vld [vmem:[#allocation11 + $0x6c] sm:$0xff]
    %v321 = vld [vmem:[#allocation11 + $0x74] sm:$0xf]
    %v322 = vld [vmem:[#allocation11 + $0x78] sm:$0xff]
    %v323 = vld [vmem:[#allocation11 + $0x80] sm:$0xf]
    %v324 = vld [vmem:[#allocation11 + $0x84] sm:$0xff]
    %v325 = vld [vmem:[#allocation11 + $0x8c] sm:$0xf]
    %v326 = vld [vmem:[#allocation11 + $0x90] sm:$0xff]
    %v327 = vld [vmem:[#allocation11 + $0x98] sm:$0xf]
    %v328 = vld [vmem:[#allocation11 + $0x9c] sm:$0xff]
    %v329 = vld [vmem:[#allocation11 + $0xa4] sm:$0xf]
    %v330 = vld [vmem:[#allocation11 + $0xa8] sm:$0xff]
    %v331 = vld [vmem:[#allocation11 + $0xb0] sm:$0xf]
    %v332 = vld [vmem:[#allocation11 + $0xb4] sm:$0xff]
    %v333 = vld [vmem:[#allocation11 + $0xbc] sm:$0xf]
    %v334 = vld [vmem:[%s7] sm:$0x7]
    %v336 = vperm.slane %v334, 0
    %v337 = vperm.slane %v334, 1
    %v338 = vperm.slane %v334, 2
    %v374 = vunpack.c.l.b16 %v302
    %v375 = vunpack.c.h.b16 %v302
    %v376 = vunpack.c.l.b16 %v303
    %v377 = vunpack.c.l.b16 %v304
    %v378 = vunpack.c.h.b16 %v304
    %v379 = vunpack.c.l.b16 %v305
    %v380 = vunpack.c.l.b16 %v306
    %v381 = vunpack.c.h.b16 %v306
    %v382 = vunpack.c.l.b16 %v307
    %v383 = vunpack.c.l.b16 %v308
    %v384 = vunpack.c.h.b16 %v308
    %v385 = vunpack.c.l.b16 %v309
    %v386 = vunpack.c.l.b16 %v310
    %v387 = vunpack.c.h.b16 %v310
    %v388 = vunpack.c.l.b16 %v311
    %v389 = vunpack.c.l.b16 %v312
    %v390 = vunpack.c.h.b16 %v312
    %v391 = vunpack.c.l.b16 %v313
    %v392 = vunpack.c.l.b16 %v314
    %v393 = vunpack.c.h.b16 %v314
    %v394 = vunpack.c.l.b16 %v315
    %v395 = vunpack.c.l.b16 %v316
    %v396 = vunpack.c.h.b16 %v316
    %v397 = vunpack.c.l.b16 %v317
    %v398 = vunpack.c.l.b16 %v318
    %v399 = vunpack.c.h.b16 %v318
    %v400 = vunpack.c.l.b16 %v319
    %v401 = vunpack.c.l.b16 %v320
    %v402 = vunpack.c.h.b16 %v320
    %v403 = vunpack.c.l.b16 %v321
    %v404 = vunpack.c.l.b16 %v322
    %v405 = vunpack.c.h.b16 %v322
    %v406 = vunpack.c.l.b16 %v323
    %v407 = vunpack.c.l.b16 %v324
    %v408 = vunpack.c.h.b16 %v324
    %v409 = vunpack.c.l.b16 %v325
    %v410 = vunpack.c.l.b16 %v326
    %v411 = vunpack.c.h.b16 %v326
    %v412 = vunpack.c.l.b16 %v327
    %v413 = vunpack.c.l.b16 %v328
    %v414 = vunpack.c.h.b16 %v328
    %v415 = vunpack.c.l.b16 %v329
    %v416 = vunpack.c.l.b16 %v330
    %v417 = vunpack.c.h.b16 %v330
    %v418 = vunpack.c.l.b16 %v331
    %v419 = vunpack.c.l.b16 %v332
    %v420 = vunpack.c.h.b16 %v332
    %v421 = vunpack.c.l.b16 %v333
    %v422 = vpack.c.b16 %v377, %v374
    %v423 = vpack.c.b16 %v378, %v375
    %v424 = vpack.c.b16 %v379, %v376
    %v425 = vpack.c.b16 %v383, %v380
    %v426 = vpack.c.b16 %v384, %v381
    %v427 = vpack.c.b16 %v385, %v382
    %v428 = vpack.c.b16 %v389, %v386
    %v429 = vpack.c.b16 %v390, %v387
    %v430 = vpack.c.b16 %v391, %v388
    %v431 = vpack.c.b16 %v395, %v392
    %v432 = vpack.c.b16 %v396, %v393
    %v433 = vpack.c.b16 %v397, %v394
    %v434 = vpack.c.b16 %v401, %v398
    %v435 = vpack.c.b16 %v402, %v399
    %v436 = vpack.c.b16 %v403, %v400
    %v437 = vpack.c.b16 %v407, %v404
    %v438 = vpack.c.b16 %v408, %v405
    %v439 = vpack.c.b16 %v409, %v406
    %v440 = vpack.c.b16 %v413, %v410
    %v441 = vpack.c.b16 %v414, %v411
    %v442 = vpack.c.b16 %v415, %v412
    %v443 = vpack.c.b16 %v419, %v416
    %v444 = vpack.c.b16 %v420, %v417
    %v445 = vpack.c.b16 %v421, %v418
    %470 = vmatpush.bf16.msra.mxu0 %v443
    %471 = vmatpush.bf16.msra.mxu0 %v440
    %472 = vmatpush.bf16.msra.mxu0 %v437
    %473 = vmatpush.bf16.msra.mxu0 %v434
    %474 = vmatpush.bf16.msra.mxu0 %v431
    %475 = vmatpush.bf16.msra.mxu0 %v428
    %476 = vmatpush.bf16.msra.mxu0 %v425
    %477 = vmatpush.bf16.msra.mxu0 %v422
    %478 = vmatmul.bf16.gmra.mxu0 %v301
    %v479 = vpop.f32.mrf.mxu0
    %v480 = vadd.f32 %v336, %v479
    %v481 = vpop.f32.mrf.mxu0
    %v482 = vadd.f32 %v336, %v481
    %483 = vdwg.mxu0
    %484 = vmatpush.bf16.msra.mxu0 %v444
    %485 = vmatpush.bf16.msra.mxu0 %v441
    %486 = vmatpush.bf16.msra.mxu0 %v438
    %487 = vmatpush.bf16.msra.mxu0 %v435
    %488 = vmatpush.bf16.msra.mxu0 %v432
    %489 = vmatpush.bf16.msra.mxu0 %v429
    %490 = vmatpush.bf16.msra.mxu0 %v426
    %491 = vmatpush.bf16.msra.mxu0 %v423
    %492 = vmatmul.bf16.gmra.mxu0 %v301
    %v493 = vpop.f32.mrf.mxu0
    %v494 = vadd.f32 %v337, %v493
    %v495 = vpop.f32.mrf.mxu0
    %v496 = vadd.f32 %v337, %v495
    %497 = vdwg.mxu0
    %498 = vmatpush.bf16.msra.mxu0 %v445
    %499 = vmatpush.bf16.msra.mxu0 %v442
    %500 = vmatpush.bf16.msra.mxu0 %v439
    %501 = vmatpush.bf16.msra.mxu0 %v436
    %502 = vmatpush.bf16.msra.mxu0 %v433
    %503 = vmatpush.bf16.msra.mxu0 %v430
    %504 = vmatpush.bf16.msra.mxu0 %v427
    %505 = vmatpush.bf16.msra.mxu0 %v424
    %506 = vmatmul.bf16.gmra.mxu0 %v301
    %v507 = vpop.f32.mrf.mxu0
    %v508 = vadd.f32 %v338, %v507
    %v509 = vpop.f32.mrf.mxu0
    %v510 = vadd.f32 %v338, %v509
    %511 = vdwg.mxu0
    %v512 = vld [vmem:[%s3] sm:$0x1]
    %v513 = vld [vmem:[%s3 + $0x1] sm:$0x1]
    %v514 = vld [vmem:[#allocation7] sm:$0xff]
    %517 = vrot.lane.b32.xlu0 %v480, 96
    %v518 = vpop.permute.xlu0 %517
    %519 = vrot.lane.b32.xlu0 %v482, 96
    %v520 = vpop.permute.xlu0 %519
    %523 = vrot.lane.b32.xlu0 %v480, 64
    %v524 = vpop.permute.xlu0 %523
    %525 = vrot.lane.b32.xlu0 %v482, 64
    %v526 = vpop.permute.xlu0 %525
    %529 = vrot.lane.b32.xlu0 %v480, 32
    %v530 = vpop.permute.xlu0 %529
    %531 = vrot.lane.b32.xlu0 %v482, 32
    %v532 = vpop.permute.xlu0 %531
    %v535 = vpack.c.bf16 %v480, %v480
    %v536 = vpack.c.bf16 %v482, %v482
    %v537 = vpack.c.bf16 %v518, %v518
    %v538 = vpack.c.bf16 %v520, %v520
    %v539 = vpack.c.bf16 %v524, %v524
    %v540 = vpack.c.bf16 %v526, %v526
    %v541 = vpack.c.bf16 %v530, %v530
    %v542 = vpack.c.bf16 %v532, %v532
    %545 = vrot.lane.b32.xlu0 %v494, 96
    %v546 = vpop.permute.xlu0 %545
    %547 = vrot.lane.b32.xlu0 %v496, 96
    %v548 = vpop.permute.xlu0 %547
    %551 = vrot.lane.b32.xlu0 %v494, 64
    %v552 = vpop.permute.xlu0 %551
    %553 = vrot.lane.b32.xlu0 %v496, 64
    %v554 = vpop.permute.xlu0 %553
    %557 = vrot.lane.b32.xlu0 %v494, 32
    %v558 = vpop.permute.xlu0 %557
    %559 = vrot.lane.b32.xlu0 %v496, 32
    %v560 = vpop.permute.xlu0 %559
    %v563 = vpack.c.bf16 %v494, %v494
    %v564 = vpack.c.bf16 %v496, %v496
    %v565 = vpack.c.bf16 %v546, %v546
    %v566 = vpack.c.bf16 %v548, %v548
    %v567 = vpack.c.bf16 %v552, %v552
    %v568 = vpack.c.bf16 %v554, %v554
    %v569 = vpack.c.bf16 %v558, %v558
    %v570 = vpack.c.bf16 %v560, %v560
    %573 = vrot.lane.b32.xlu0 %v508, 96
    %v574 = vpop.permute.xlu0 %573
    %575 = vrot.lane.b32.xlu0 %v510, 96
    %v576 = vpop.permute.xlu0 %575
    %579 = vrot.lane.b32.xlu0 %v508, 64
    %v580 = vpop.permute.xlu0 %579
    %581 = vrot.lane.b32.xlu0 %v510, 64
    %v582 = vpop.permute.xlu0 %581
    %585 = vrot.lane.b32.xlu0 %v508, 32
    %v586 = vpop.permute.xlu0 %585
    %587 = vrot.lane.b32.xlu0 %v510, 32
    %v588 = vpop.permute.xlu0 %587
    %v591 = vpack.c.bf16 %v508, %v508
    %v592 = vpack.c.bf16 %v510, %v510
    %v593 = vpack.c.bf16 %v574, %v574
    %v594 = vpack.c.bf16 %v576, %v576
    %v595 = vpack.c.bf16 %v580, %v580
    %v596 = vpack.c.bf16 %v582, %v582
    %v597 = vpack.c.bf16 %v586, %v586
    %v598 = vpack.c.bf16 %v588, %v588
    %vm599 = vcmask 261120
    %v601 = vsel %vm599, %v535, 0
    %v604 = vsel %vm599, %v563, 0
    %606 = vmatpush.bf16.xpose.msra.mxu0 0
    %607 = vmatpush.bf16.xpose.msra.mxu0 0
    %608 = vmatpush.bf16.xpose.msra.mxu0 0
    %609 = vmatpush.bf16.xpose.msra.mxu0 0
    %610 = vmatpush.bf16.xpose.msra.mxu0 0
    %611 = vmatpush.bf16.xpose.msra.mxu0 0
    %612 = vmatpush.bf16.xpose.msra.mxu0 0
    %613 = vmatpush.bf16.xpose.msra.mxu0 %v604
    %614 = vmatmul.bf16.gmra.mxu0 %v601
    %v615 = vpop.f32.mrf.mxu0
    %v616 = vadd.f32 0.0, %v615
    %v617 = vpop.f32.mrf.mxu0
    %618 = vdwg.mxu0
    %v620 = vsel %vm599, %v536, 0
    %v623 = vsel %vm599, %v564, 0
    %625 = vmatpush.bf16.xpose.msra.mxu0 0
    %626 = vmatpush.bf16.xpose.msra.mxu0 0
    %627 = vmatpush.bf16.xpose.msra.mxu0 0
    %628 = vmatpush.bf16.xpose.msra.mxu0 0
    %629 = vmatpush.bf16.xpose.msra.mxu0 0
    %630 = vmatpush.bf16.xpose.msra.mxu0 0
    %631 = vmatpush.bf16.xpose.msra.mxu0 0
    %632 = vmatpush.bf16.xpose.msra.mxu0 %v623
    %633 = vmatmul.bf16.gmra.mxu0 %v620
    %v634 = vpop.f32.mrf.mxu0
    %v635 = vadd.f32 0.0, %v634
    %v636 = vpop.f32.mrf.mxu0
    %637 = vdwg.mxu0
    %v639 = vsel %vm599, %v537, 0
    %v642 = vsel %vm599, %v565, 0
    %644 = vmatpush.bf16.xpose.msra.mxu0 0
    %645 = vmatpush.bf16.xpose.msra.mxu0 0
    %646 = vmatpush.bf16.xpose.msra.mxu0 0
    %647 = vmatpush.bf16.xpose.msra.mxu0 0
    %648 = vmatpush.bf16.xpose.msra.mxu0 0
    %649 = vmatpush.bf16.xpose.msra.mxu0 0
    %650 = vmatpush.bf16.xpose.msra.mxu0 0
    %651 = vmatpush.bf16.xpose.msra.mxu0 %v642
    %652 = vmatmul.bf16.gmra.mxu0 %v639
    %v653 = vpop.f32.mrf.mxu0
    %v654 = vadd.f32 0.0, %v653
    %v655 = vpop.f32.mrf.mxu0
    %656 = vdwg.mxu0
    %v658 = vsel %vm599, %v538, 0
    %v661 = vsel %vm599, %v566, 0
    %663 = vmatpush.bf16.xpose.msra.mxu0 0
    %664 = vmatpush.bf16.xpose.msra.mxu0 0
    %665 = vmatpush.bf16.xpose.msra.mxu0 0
    %666 = vmatpush.bf16.xpose.msra.mxu0 0
    %667 = vmatpush.bf16.xpose.msra.mxu0 0
    %668 = vmatpush.bf16.xpose.msra.mxu0 0
    %669 = vmatpush.bf16.xpose.msra.mxu0 0
    %670 = vmatpush.bf16.xpose.msra.mxu0 %v661
    %671 = vmatmul.bf16.gmra.mxu0 %v658
    %v672 = vpop.f32.mrf.mxu0
    %v673 = vadd.f32 0.0, %v672
    %v674 = vpop.f32.mrf.mxu0
    %675 = vdwg.mxu0
    %v677 = vsel %vm599, %v539, 0
    %v680 = vsel %vm599, %v567, 0
    %682 = vmatpush.bf16.xpose.msra.mxu0 0
    %683 = vmatpush.bf16.xpose.msra.mxu0 0
    %684 = vmatpush.bf16.xpose.msra.mxu0 0
    %685 = vmatpush.bf16.xpose.msra.mxu0 0
    %686 = vmatpush.bf16.xpose.msra.mxu0 0
    %687 = vmatpush.bf16.xpose.msra.mxu0 0
    %688 = vmatpush.bf16.xpose.msra.mxu0 0
    %689 = vmatpush.bf16.xpose.msra.mxu0 %v680
    %690 = vmatmul.bf16.gmra.mxu0 %v677
    %v691 = vpop.f32.mrf.mxu0
    %v692 = vadd.f32 0.0, %v691
    %v693 = vpop.f32.mrf.mxu0
    %694 = vdwg.mxu0
    %v696 = vsel %vm599, %v540, 0
    %v699 = vsel %vm599, %v568, 0
    %701 = vmatpush.bf16.xpose.msra.mxu0 0
    %702 = vmatpush.bf16.xpose.msra.mxu0 0
    %703 = vmatpush.bf16.xpose.msra.mxu0 0
    %704 = vmatpush.bf16.xpose.msra.mxu0 0
    %705 = vmatpush.bf16.xpose.msra.mxu0 0
    %706 = vmatpush.bf16.xpose.msra.mxu0 0
    %707 = vmatpush.bf16.xpose.msra.mxu0 0
    %708 = vmatpush.bf16.xpose.msra.mxu0 %v699
    %709 = vmatmul.bf16.gmra.mxu0 %v696
    %v710 = vpop.f32.mrf.mxu0
    %v711 = vadd.f32 0.0, %v710
    %v712 = vpop.f32.mrf.mxu0
    %713 = vdwg.mxu0
    %v715 = vsel %vm599, %v541, 0
    %v718 = vsel %vm599, %v569, 0
    %720 = vmatpush.bf16.xpose.msra.mxu0 0
    %721 = vmatpush.bf16.xpose.msra.mxu0 0
    %722 = vmatpush.bf16.xpose.msra.mxu0 0
    %723 = vmatpush.bf16.xpose.msra.mxu0 0
    %724 = vmatpush.bf16.xpose.msra.mxu0 0
    %725 = vmatpush.bf16.xpose.msra.mxu0 0
    %726 = vmatpush.bf16.xpose.msra.mxu0 0
    %727 = vmatpush.bf16.xpose.msra.mxu0 %v718
    %728 = vmatmul.bf16.gmra.mxu0 %v715
    %v729 = vpop.f32.mrf.mxu0
    %v730 = vadd.f32 0.0, %v729
    %v731 = vpop.f32.mrf.mxu0
    %732 = vdwg.mxu0
    %v734 = vsel %vm599, %v542, 0
    %v737 = vsel %vm599, %v570, 0
    %739 = vmatpush.bf16.xpose.msra.mxu0 0
    %740 = vmatpush.bf16.xpose.msra.mxu0 0
    %741 = vmatpush.bf16.xpose.msra.mxu0 0
    %742 = vmatpush.bf16.xpose.msra.mxu0 0
    %743 = vmatpush.bf16.xpose.msra.mxu0 0
    %744 = vmatpush.bf16.xpose.msra.mxu0 0
    %745 = vmatpush.bf16.xpose.msra.mxu0 0
    %746 = vmatpush.bf16.xpose.msra.mxu0 %v737
    %747 = vmatmul.bf16.gmra.mxu0 %v734
    %v748 = vpop.f32.mrf.mxu0
    %v749 = vadd.f32 0.0, %v748
    %v750 = vpop.f32.mrf.mxu0
    %751 = vdwg.mxu0
    %v752 = vmul.f32 %v616, 0.17677669
    %v753 = vmul.f32 %v635, 0.17677669
    %v754 = vmul.f32 %v654, 0.17677669
    %v755 = vmul.f32 %v673, 0.17677669
    %v756 = vmul.f32 %v692, 0.17677669
    %v757 = vmul.f32 %v711, 0.17677669
    %v758 = vmul.f32 %v730, 0.17677669
    %v759 = vmul.f32 %v749, 0.17677669
    %v762 = vperm.slane %v512, 0
    %v763 = vperm.slane %v513, 0
    %v766 = vadd.f32 %v762, %v514
    %v767 = vadd.f32 %v763, %v514
    %v768 = vadd.f32 %v752, %v766
    %v769 = vadd.f32 %v753, %v767
    %v770 = vadd.f32 %v754, %v766
    %v771 = vadd.f32 %v755, %v767
    %v772 = vadd.f32 %v756, %v766
    %v773 = vadd.f32 %v757, %v767
    %v774 = vadd.f32 %v758, %v766
    %v775 = vadd.f32 %v759, %v767
    %vm776 = vcmask 64512
    %v777 = vsel %vm776, %v768, -inf
    %778 = vmax.xlane.f32.xlu0 %v777
    %v779 = vpop.xlane.xlu0 %778
    %v780 = vsel %vm776, %v769, -inf
    %781 = vmax.xlane.f32.xlu0 %v780
    %v782 = vpop.xlane.xlu0 %781
    %v783 = vsel %vm776, %v770, -inf
    %784 = vmax.xlane.f32.xlu0 %v783
    %v785 = vpop.xlane.xlu0 %784
    %v786 = vsel %vm776, %v771, -inf
    %787 = vmax.xlane.f32.xlu0 %v786
    %v788 = vpop.xlane.xlu0 %787
    %v789 = vsel %vm776, %v772, -inf
    %790 = vmax.xlane.f32.xlu0 %v789
    %v791 = vpop.xlane.xlu0 %790
    %v792 = vsel %vm776, %v773, -inf
    %793 = vmax.xlane.f32.xlu0 %v792
    %v794 = vpop.xlane.xlu0 %793
    %v795 = vsel %vm776, %v774, -inf
    %796 = vmax.xlane.f32.xlu0 %v795
    %v797 = vpop.xlane.xlu0 %796
    %v798 = vsel %vm776, %v775, -inf
    %799 = vmax.xlane.f32.xlu0 %v798
    %v800 = vpop.xlane.xlu0 %799
    %v801 = vsub.f32 %v768, %v779
    %v802 = vsub.f32 %v769, %v782
    %v803 = vsub.f32 %v770, %v785
    %v804 = vsub.f32 %v771, %v788
    %v805 = vsub.f32 %v772, %v791
    %v806 = vsub.f32 %v773, %v794
    %v807 = vsub.f32 %v774, %v797
    %v808 = vsub.f32 %v775, %v800
    %v809 = vmul.f32 %v801, 1.442695
    %v810 = vpow.pop %v809
    %v811 = vmul.f32 %v802, 1.442695
    %v812 = vpow.pop %v811
    %v813 = vmul.f32 %v803, 1.442695
    %v814 = vpow.pop %v813
    %v815 = vmul.f32 %v804, 1.442695
    %v816 = vpow.pop %v815
    %v817 = vmul.f32 %v805, 1.442695
    %v818 = vpow.pop %v817
    %v819 = vmul.f32 %v806, 1.442695
    %v820 = vpow.pop %v819
    %v821 = vmul.f32 %v807, 1.442695
    %v822 = vpow.pop %v821
    %v823 = vmul.f32 %v808, 1.442695
    %v824 = vpow.pop %v823
    %v825 = vsel %vm776, %v810, 0.0
    %826 = vadd.xlane.f32.xlu0 %v825
    %v827 = vpop.xlane.xlu0 %826
    %v828 = vsel %vm776, %v812, 0.0
    %829 = vadd.xlane.f32.xlu0 %v828
    %v830 = vpop.xlane.xlu0 %829
    %v831 = vsel %vm776, %v814, 0.0
    %832 = vadd.xlane.f32.xlu0 %v831
    %v833 = vpop.xlane.xlu0 %832
    %v834 = vsel %vm776, %v816, 0.0
    %835 = vadd.xlane.f32.xlu0 %v834
    %v836 = vpop.xlane.xlu0 %835
    %v837 = vsel %vm776, %v818, 0.0
    %838 = vadd.xlane.f32.xlu0 %v837
    %v839 = vpop.xlane.xlu0 %838
    %v840 = vsel %vm776, %v820, 0.0
    %841 = vadd.xlane.f32.xlu0 %v840
    %v842 = vpop.xlane.xlu0 %841
    %v843 = vsel %vm776, %v822, 0.0
    %844 = vadd.xlane.f32.xlu0 %v843
    %v845 = vpop.xlane.xlu0 %844
    %v846 = vsel %vm776, %v824, 0.0
    %847 = vadd.xlane.f32.xlu0 %v846
    %v848 = vpop.xlane.xlu0 %847
    %v849 = vrcp.pop %v827
    %v850 = vrcp.pop %v830
    %v851 = vrcp.pop %v833
    %v852 = vrcp.pop %v836
    %v853 = vrcp.pop %v839
    %v854 = vrcp.pop %v842
    %v855 = vrcp.pop %v845
    %v856 = vrcp.pop %v848
    %v857 = vmul.f32 %v810, %v849
    %v858 = vmul.f32 %v812, %v850
    %v859 = vmul.f32 %v814, %v851
    %v860 = vmul.f32 %v816, %v852
    %v861 = vmul.f32 %v818, %v853
    %v862 = vmul.f32 %v820, %v854
    %v863 = vmul.f32 %v822, %v855
    %v864 = vmul.f32 %v824, %v856
    %v865 = vpack.c.bf16 %v857, %v857
    %v866 = vpack.c.bf16 %v858, %v858
    %v867 = vpack.c.bf16 %v859, %v859
    %v868 = vpack.c.bf16 %v860, %v860
    %v869 = vpack.c.bf16 %v861, %v861
    %v870 = vpack.c.bf16 %v862, %v862
    %v871 = vpack.c.bf16 %v863, %v863
    %v872 = vpack.c.bf16 %v864, %v864
    %v874 = vsel %vm776, %v865, 0
    %vm876 = vcmask 1043456
    %v878 = vsel %vm876, %v591, 0
    %880 = vmatpush.bf16.msra.mxu0 0
    %881 = vmatpush.bf16.msra.mxu0 0
    %882 = vmatpush.bf16.msra.mxu0 0
    %883 = vmatpush.bf16.msra.mxu0 0
    %884 = vmatpush.bf16.msra.mxu0 0
    %885 = vmatpush.bf16.msra.mxu0 0
    %886 = vmatpush.bf16.msra.mxu0 0
    %887 = vmatpush.bf16.msra.mxu0 %v878
    %888 = vmatmul.bf16.gmra.mxu0 %v874
    %v889 = vpop.f32.mrf.mxu0
    %v890 = vadd.f32 0.0, %v889
    %v891 = vpop.f32.mrf.mxu0
    %892 = vdwg.mxu0
    %v894 = vsel %vm776, %v866, 0
    %v897 = vsel %vm876, %v592, 0
    %899 = vmatpush.bf16.msra.mxu0 0
    %900 = vmatpush.bf16.msra.mxu0 0
    %901 = vmatpush.bf16.msra.mxu0 0
    %902 = vmatpush.bf16.msra.mxu0 0
    %903 = vmatpush.bf16.msra.mxu0 0
    %904 = vmatpush.bf16.msra.mxu0 0
    %905 = vmatpush.bf16.msra.mxu0 0
    %906 = vmatpush.bf16.msra.mxu0 %v897
    %907 = vmatmul.bf16.gmra.mxu0 %v894
    %v908 = vpop.f32.mrf.mxu0
    %v909 = vadd.f32 0.0, %v908
    %v910 = vpop.f32.mrf.mxu0
    %911 = vdwg.mxu0
    %v913 = vsel %vm776, %v867, 0
    %v916 = vsel %vm876, %v593, 0
    %918 = vmatpush.bf16.msra.mxu0 0
    %919 = vmatpush.bf16.msra.mxu0 0
    %920 = vmatpush.bf16.msra.mxu0 0
    %921 = vmatpush.bf16.msra.mxu0 0
    %922 = vmatpush.bf16.msra.mxu0 0
    %923 = vmatpush.bf16.msra.mxu0 0
    %924 = vmatpush.bf16.msra.mxu0 0
    %925 = vmatpush.bf16.msra.mxu0 %v916
    %926 = vmatmul.bf16.gmra.mxu0 %v913
    %v927 = vpop.f32.mrf.mxu0
    %v928 = vadd.f32 0.0, %v927
    %v929 = vpop.f32.mrf.mxu0
    %930 = vdwg.mxu0
    %v932 = vsel %vm776, %v868, 0
    %v935 = vsel %vm876, %v594, 0
    %937 = vmatpush.bf16.msra.mxu0 0
    %938 = vmatpush.bf16.msra.mxu0 0
    %939 = vmatpush.bf16.msra.mxu0 0
    %940 = vmatpush.bf16.msra.mxu0 0
    %941 = vmatpush.bf16.msra.mxu0 0
    %942 = vmatpush.bf16.msra.mxu0 0
    %943 = vmatpush.bf16.msra.mxu0 0
    %944 = vmatpush.bf16.msra.mxu0 %v935
    %945 = vmatmul.bf16.gmra.mxu0 %v932
    %v946 = vpop.f32.mrf.mxu0
    %v947 = vadd.f32 0.0, %v946
    %v948 = vpop.f32.mrf.mxu0
    %949 = vdwg.mxu0
    %v951 = vsel %vm776, %v869, 0
    %v954 = vsel %vm876, %v595, 0
    %956 = vmatpush.bf16.msra.mxu0 0
    %957 = vmatpush.bf16.msra.mxu0 0
    %958 = vmatpush.bf16.msra.mxu0 0
    %959 = vmatpush.bf16.msra.mxu0 0
    %960 = vmatpush.bf16.msra.mxu0 0
    %961 = vmatpush.bf16.msra.mxu0 0
    %962 = vmatpush.bf16.msra.mxu0 0
    %963 = vmatpush.bf16.msra.mxu0 %v954
    %964 = vmatmul.bf16.gmra.mxu0 %v951
    %v965 = vpop.f32.mrf.mxu0
    %v966 = vadd.f32 0.0, %v965
    %v967 = vpop.f32.mrf.mxu0
    %968 = vdwg.mxu0
    %v970 = vsel %vm776, %v870, 0
    %v973 = vsel %vm876, %v596, 0
    %975 = vmatpush.bf16.msra.mxu0 0
    %976 = vmatpush.bf16.msra.mxu0 0
    %977 = vmatpush.bf16.msra.mxu0 0
    %978 = vmatpush.bf16.msra.mxu0 0
    %979 = vmatpush.bf16.msra.mxu0 0
    %980 = vmatpush.bf16.msra.mxu0 0
    %981 = vmatpush.bf16.msra.mxu0 0
    %982 = vmatpush.bf16.msra.mxu0 %v973
    %983 = vmatmul.bf16.gmra.mxu0 %v970
    %v984 = vpop.f32.mrf.mxu0
    %v985 = vadd.f32 0.0, %v984
    %v986 = vpop.f32.mrf.mxu0
    %987 = vdwg.mxu0
    %v989 = vsel %vm776, %v871, 0
    %v992 = vsel %vm876, %v597, 0
    %994 = vmatpush.bf16.msra.mxu0 0
    %995 = vmatpush.bf16.msra.mxu0 0
    %996 = vmatpush.bf16.msra.mxu0 0
    %997 = vmatpush.bf16.msra.mxu0 0
    %998 = vmatpush.bf16.msra.mxu0 0
    %999 = vmatpush.bf16.msra.mxu0 0
    %1000 = vmatpush.bf16.msra.mxu0 0
    %1001 = vmatpush.bf16.msra.mxu0 %v992
    %1002 = vmatmul.bf16.gmra.mxu0 %v989
    %v1003 = vpop.f32.mrf.mxu0
    %v1004 = vadd.f32 0.0, %v1003
    %v1005 = vpop.f32.mrf.mxu0
    %1006 = vdwg.mxu0
    %v1008 = vsel %vm776, %v872, 0
    %v1011 = vsel %vm876, %v598, 0
    %1013 = vmatpush.bf16.msra.mxu0 0
    %1014 = vmatpush.bf16.msra.mxu0 0
    %1015 = vmatpush.bf16.msra.mxu0 0
    %1016 = vmatpush.bf16.msra.mxu0 0
    %1017 = vmatpush.bf16.msra.mxu0 0
    %1018 = vmatpush.bf16.msra.mxu0 0
    %1019 = vmatpush.bf16.msra.mxu0 0
    %1020 = vmatpush.bf16.msra.mxu0 %v1011
    %1021 = vmatmul.bf16.gmra.mxu0 %v1008
    %v1022 = vpop.f32.mrf.mxu0
    %v1023 = vadd.f32 0.0, %v1022
    %v1024 = vpop.f32.mrf.mxu0
    %1025 = vdwg.mxu0
    %1028 = vrot.lane.b32.xlu0 %v928, 32
    %v1029 = vpop.permute.xlu0 %1028
    %1030 = vrot.lane.b32.xlu0 %v947, 32
    %v1031 = vpop.permute.xlu0 %1030
    %1036 = vrot.lane.b32.xlu0 %v966, 64
    %v1037 = vpop.permute.xlu0 %1036
    %1038 = vrot.lane.b32.xlu0 %v985, 64
    %v1039 = vpop.permute.xlu0 %1038
    %1044 = vrot.lane.b32.xlu0 %v1004, 96
    %v1045 = vpop.permute.xlu0 %1044
    %1046 = vrot.lane.b32.xlu0 %v1023, 96
    %v1047 = vpop.permute.xlu0 %1046
    %v1050 = vsel %vm599, %v890, %v1029
    %v1051 = vsel %vm599, %v909, %v1031
    %vm1052 = vcmask 523264
    %v1053 = vsel %vm1052, %v1050, %v1037
    %v1054 = vsel %vm1052, %v1051, %v1039
    %vm1055 = vcmask 785408
    %v1056 = vsel %vm1055, %v1053, %v1045
    %v1057 = vsel %vm1055, %v1054, %v1047
    %v1058 = vpack.c.bf16 %v1057, %v1056
    %v1059 = vld [vmem:[#allocation13] sm:$0xf]
    %v1060 = vld [vmem:[#allocation13 + $0x4] sm:$0xf]
    %v1061 = vld [vmem:[#allocation13 + $0x8] sm:$0xf]
    %v1062 = vld [vmem:[#allocation13 + $0xc] sm:$0xf]
    %v1063 = vld [vmem:[#allocation13 + $0x10] sm:$0xf]
    %v1064 = vld [vmem:[#allocation13 + $0x14] sm:$0xf]
    %v1065 = vld [vmem:[#allocation13 + $0x18] sm:$0xf]
    %v1066 = vld [vmem:[#allocation13 + $0x1c] sm:$0xf]
    %v1067 = vld [vmem:[#allocation13 + $0x20] sm:$0xf]
    %v1068 = vld [vmem:[#allocation13 + $0x24] sm:$0xf]
    %v1069 = vld [vmem:[#allocation13 + $0x28] sm:$0xf]
    %v1070 = vld [vmem:[#allocation13 + $0x2c] sm:$0xf]
    %v1071 = vld [vmem:[#allocation13 + $0x30] sm:$0xf]
    %v1072 = vld [vmem:[#allocation13 + $0x34] sm:$0xf]
    %v1073 = vld [vmem:[#allocation13 + $0x38] sm:$0xf]
    %v1074 = vld [vmem:[#allocation13 + $0x3c] sm:$0xf]
    %v1075 = vld [vmem:[#allocation14] sm:$0x1]
    %v1077 = vperm.slane %v1075, 0
    %v1095 = vunpack.c.l.b16 %v1059
    %v1096 = vunpack.c.l.b16 %v1060
    %v1097 = vunpack.c.l.b16 %v1061
    %v1098 = vunpack.c.l.b16 %v1062
    %v1099 = vunpack.c.l.b16 %v1063
    %v1100 = vunpack.c.l.b16 %v1064
    %v1101 = vunpack.c.l.b16 %v1065
    %v1102 = vunpack.c.l.b16 %v1066
    %v1103 = vunpack.c.l.b16 %v1067
    %v1104 = vunpack.c.l.b16 %v1068
    %v1105 = vunpack.c.l.b16 %v1069
    %v1106 = vunpack.c.l.b16 %v1070
    %v1107 = vunpack.c.l.b16 %v1071
    %v1108 = vunpack.c.l.b16 %v1072
    %v1109 = vunpack.c.l.b16 %v1073
    %v1110 = vunpack.c.l.b16 %v1074
    %v1111 = vpack.c.b16 %v1096, %v1095
    %v1112 = vpack.c.b16 %v1098, %v1097
    %v1113 = vpack.c.b16 %v1100, %v1099
    %v1114 = vpack.c.b16 %v1102, %v1101
    %v1115 = vpack.c.b16 %v1104, %v1103
    %v1116 = vpack.c.b16 %v1106, %v1105
    %v1117 = vpack.c.b16 %v1108, %v1107
    %v1118 = vpack.c.b16 %v1110, %v1109
    %1127 = vmatpush.bf16.msra.mxu0 %v1118
    %1128 = vmatpush.bf16.msra.mxu0 %v1117
    %1129 = vmatpush.bf16.msra.mxu0 %v1116
    %1130 = vmatpush.bf16.msra.mxu0 %v1115
    %1131 = vmatpush.bf16.msra.mxu0 %v1114
    %1132 = vmatpush.bf16.msra.mxu0 %v1113
    %1133 = vmatpush.bf16.msra.mxu0 %v1112
    %1134 = vmatpush.bf16.msra.mxu0 %v1111
    %1135 = vmatmul.bf16.gmra.mxu0 %v1058
    %v1136 = vpop.f32.mrf.mxu0
    %v1137 = vadd.f32 %v1077, %v1136
    %v1138 = vpop.f32.mrf.mxu0
    %v1139 = vadd.f32 %v1077, %v1138
    %1140 = vdwg.mxu0
    %v1141 = vadd.f32 %v1137, %v297
    %v1142 = vadd.f32 %v1139, %v298
    %v1143 = vld [vmem:[%s16] sm:$0x1]
    %v1144 = vld [vmem:[%s17] sm:$0x1]
    %1145 = vadd.xlane.f32.xlu0 %v1141
    %v1146 = vpop.xlane.xlu0 %1145
    %1147 = vadd.xlane.f32.xlu0 %v1142
    %v1148 = vpop.xlane.xlu0 %1147
    %v1149 = vrcp.pop 128.0
    %v1150 = vmul.f32 128.0, %v1149
    %v1151 = vsub.f32 1.0, %v1150
    %v1152 = vmul.f32 %v1149, %v1151
    %v1153 = vadd.f32 %v1149, %v1152
    %vm1154 = vweird.f32 %v1149
    %v1155 = vsel %vm1154, %v1149, %v1153
    %v1156 = vmul.f32 %v1146, %v1155
    %v1157 = vmul.f32 %v1148, %v1155
    %v1158 = vmul.f32 %v1141, %v1141
    %v1159 = vmul.f32 %v1142, %v1142
    %1160 = vadd.xlane.f32.xlu0 %v1158
    %v1161 = vpop.xlane.xlu0 %1160
    %1162 = vadd.xlane.f32.xlu0 %v1159
    %v1163 = vpop.xlane.xlu0 %1162
    %v1164 = vmul.f32 %v1161, %v1155
    %v1165 = vmul.f32 %v1163, %v1155
    %v1166 = vmul.f32 %v1156, %v1156
    %v1167 = vmul.f32 %v1157, %v1157
    %v1168 = vsub.f32 %v1164, %v1166
    %v1169 = vsub.f32 %v1165, %v1167
    %v1170 = vmax.f32 %v1168, 0.0
    %v1171 = vmax.f32 %v1169, 0.0
    %v1172 = vsub.f32 %v1141, %v1156
    %v1173 = vsub.f32 %v1142, %v1157
    %v1174 = vadd.f32 %v1170, 1e-05
    %v1175 = vadd.f32 %v1171, 1e-05
    %v1176 = vrsqrt.pop %v1174
    %v1177 = vmul.f32 %v1176, %v1174
    %v1178 = vmul.f32 %v1177, %v1176
    %v1179 = vmul.f32 0.5, %v1178
    %v1180 = vsub.f32 1.5, %v1179
    %v1181 = vmul.f32 %v1176, %v1180
    %vm1182 = vweird.f32 %v1174
    %vm1183 = vweird.f32 %v1176
    %vm1184 = vmor %vm1182, %vm1183
    %v1185 = vsel %vm1184, %v1176, %v1181
    %v1186 = vrsqrt.pop %v1175
    %v1187 = vmul.f32 %v1186, %v1175
    %v1188 = vmul.f32 %v1187, %v1186
    %v1189 = vmul.f32 0.5, %v1188
    %v1190 = vsub.f32 1.5, %v1189
    %v1191 = vmul.f32 %v1186, %v1190
    %vm1192 = vweird.f32 %v1175
    %vm1193 = vweird.f32 %v1186
    %vm1194 = vmor %vm1192, %vm1193
    %v1195 = vsel %vm1194, %v1186, %v1191
    %v1196 = vmul.f32 %v1172, %v1185
    %v1197 = vmul.f32 %v1173, %v1195
    %v1199 = vperm.slane %v1143, 0
    %v1201 = vmul.f32 %v1196, %v1199
    %v1202 = vmul.f32 %v1197, %v1199
    %v1204 = vperm.slane %v1144, 0
    %v1206 = vadd.f32 %v1201, %v1204
    %v1207 = vadd.f32 %v1202, %v1204
    %v1208 = vpack.c.bf16 %v1207, %v1206
    %v1209 = vld [vmem:[#allocation16] sm:$0xf]
    %v1210 = vld [vmem:[#allocation16 + $0x4] sm:$0xf]
    %v1211 = vld [vmem:[#allocation16 + $0x8] sm:$0xf]
    %v1212 = vld [vmem:[#allocation16 + $0xc] sm:$0xf]
    %v1213 = vld [vmem:[#allocation16 + $0x10] sm:$0xf]
    %v1214 = vld [vmem:[#allocation16 + $0x14] sm:$0xf]
    %v1215 = vld [vmem:[#allocation16 + $0x18] sm:$0xf]
    %v1216 = vld [vmem:[#allocation16 + $0x1c] sm:$0xf]
    %v1217 = vld [vmem:[#allocation16 + $0x20] sm:$0xf]
    %v1218 = vld [vmem:[#allocation16 + $0x24] sm:$0xf]
    %v1219 = vld [vmem:[#allocation16 + $0x28] sm:$0xf]
    %v1220 = vld [vmem:[#allocation16 + $0x2c] sm:$0xf]
    %v1221 = vld [vmem:[#allocation16 + $0x30] sm:$0xf]
    %v1222 = vld [vmem:[#allocation16 + $0x34] sm:$0xf]
    %v1223 = vld [vmem:[#allocation16 + $0x38] sm:$0xf]
    %v1224 = vld [vmem:[#allocation16 + $0x3c] sm:$0xf]
    %v1225 = vld [vmem:[#allocation17] sm:$0x1]
    %v1227 = vperm.slane %v1225, 0
    %v1245 = vunpack.c.l.b16 %v1209
    %v1246 = vunpack.c.l.b16 %v1210
    %v1247 = vunpack.c.l.b16 %v1211
    %v1248 = vunpack.c.l.b16 %v1212
    %v1249 = vunpack.c.l.b16 %v1213
    %v1250 = vunpack.c.l.b16 %v1214
    %v1251 = vunpack.c.l.b16 %v1215
    %v1252 = vunpack.c.l.b16 %v1216
    %v1253 = vunpack.c.l.b16 %v1217
    %v1254 = vunpack.c.l.b16 %v1218
    %v1255 = vunpack.c.l.b16 %v1219
    %v1256 = vunpack.c.l.b16 %v1220
    %v1257 = vunpack.c.l.b16 %v1221
    %v1258 = vunpack.c.l.b16 %v1222
    %v1259 = vunpack.c.l.b16 %v1223
    %v1260 = vunpack.c.l.b16 %v1224
    %v1261 = vpack.c.b16 %v1246, %v1245
    %v1262 = vpack.c.b16 %v1248, %v1247
    %v1263 = vpack.c.b16 %v1250, %v1249
    %v1264 = vpack.c.b16 %v1252, %v1251
    %v1265 = vpack.c.b16 %v1254, %v1253
    %v1266 = vpack.c.b16 %v1256, %v1255
    %v1267 = vpack.c.b16 %v1258, %v1257
    %v1268 = vpack.c.b16 %v1260, %v1259
    %1277 = vmatpush.bf16.msra.mxu0 %v1268
    %1278 = vmatpush.bf16.msra.mxu0 %v1267
    %1279 = vmatpush.bf16.msra.mxu0 %v1266
    %1280 = vmatpush.bf16.msra.mxu0 %v1265
    %1281 = vmatpush.bf16.msra.mxu0 %v1264
    %1282 = vmatpush.bf16.msra.mxu0 %v1263
    %1283 = vmatpush.bf16.msra.mxu0 %v1262
    %1284 = vmatpush.bf16.msra.mxu0 %v1261
    %1285 = vmatmul.bf16.gmra.mxu0 %v1208
    %v1286 = vpop.f32.mrf.mxu0
    %v1287 = vadd.f32 %v1227, %v1286
    %v1288 = vpop.f32.mrf.mxu0
    %v1289 = vadd.f32 %v1227, %v1288
    %1290 = vdwg.mxu0
    %v1291 = vpack.c.bf16 %v300, %v299
    %v1292 = vld [vmem:[#allocation19] sm:$0xff]
    %v1293 = vld [vmem:[#allocation19 + $0x8] sm:$0xff]
    %v1294 = vld [vmem:[#allocation19 + $0x10] sm:$0xff]
    %v1295 = vld [vmem:[#allocation19 + $0x18] sm:$0xff]
    %v1296 = vld [vmem:[#allocation19 + $0x20] sm:$0xff]
    %v1297 = vld [vmem:[#allocation19 + $0x28] sm:$0xff]
    %v1298 = vld [vmem:[#allocation19 + $0x30] sm:$0xff]
    %v1299 = vld [vmem:[#allocation19 + $0x38] sm:$0xff]
    %v1300 = vld [vmem:[#allocation19 + $0x40] sm:$0xff]
    %v1301 = vld [vmem:[#allocation19 + $0x48] sm:$0xff]
    %v1302 = vld [vmem:[#allocation19 + $0x50] sm:$0xff]
    %v1303 = vld [vmem:[#allocation19 + $0x58] sm:$0xff]
    %v1304 = vld [vmem:[#allocation19 + $0x60] sm:$0xff]
    %v1305 = vld [vmem:[#allocation19 + $0x68] sm:$0xff]
    %v1306 = vld [vmem:[#allocation19 + $0x70] sm:$0xff]
    %v1307 = vld [vmem:[#allocation19 + $0x78] sm:$0xff]
    %v1308 = vld [vmem:[%s13] sm:$0x3]
    %v1310 = vperm.slane %v1308, 0
    %v1311 = vperm.slane %v1308, 1
    %v1330 = vunpack.c.l.b16 %v1292
    %v1331 = vunpack.c.h.b16 %v1292
    %v1332 = vunpack.c.l.b16 %v1293
    %v1333 = vunpack.c.h.b16 %v1293
    %v1334 = vunpack.c.l.b16 %v1294
    %v1335 = vunpack.c.h.b16 %v1294
    %v1336 = vunpack.c.l.b16 %v1295
    %v1337 = vunpack.c.h.b16 %v1295
    %v1338 = vunpack.c.l.b16 %v1296
    %v1339 = vunpack.c.h.b16 %v1296
    %v1340 = vunpack.c.l.b16 %v1297
    %v1341 = vunpack.c.h.b16 %v1297
    %v1342 = vunpack.c.l.b16 %v1298
    %v1343 = vunpack.c.h.b16 %v1298
    %v1344 = vunpack.c.l.b16 %v1299
    %v1345 = vunpack.c.h.b16 %v1299
    %v1346 = vunpack.c.l.b16 %v1300
    %v1347 = vunpack.c.h.b16 %v1300
    %v1348 = vunpack.c.l.b16 %v1301
    %v1349 = vunpack.c.h.b16 %v1301
    %v1350 = vunpack.c.l.b16 %v1302
    %v1351 = vunpack.c.h.b16 %v1302
    %v1352 = vunpack.c.l.b16 %v1303
    %v1353 = vunpack.c.h.b16 %v1303
    %v1354 = vunpack.c.l.b16 %v1304
    %v1355 = vunpack.c.h.b16 %v1304
    %v1356 = vunpack.c.l.b16 %v1305
    %v1357 = vunpack.c.h.b16 %v1305
    %v1358 = vunpack.c.l.b16 %v1306
    %v1359 = vunpack.c.h.b16 %v1306
    %v1360 = vunpack.c.l.b16 %v1307
    %v1361 = vunpack.c.h.b16 %v1307
    %v1362 = vpack.c.b16 %v1332, %v1330
    %v1363 = vpack.c.b16 %v1333, %v1331
    %v1364 = vpack.c.b16 %v1336, %v1334
    %v1365 = vpack.c.b16 %v1337, %v1335
    %v1366 = vpack.c.b16 %v1340, %v1338
    %v1367 = vpack.c.b16 %v1341, %v1339
    %v1368 = vpack.c.b16 %v1344, %v1342
    %v1369 = vpack.c.b16 %v1345, %v1343
    %v1370 = vpack.c.b16 %v1348, %v1346
    %v1371 = vpack.c.b16 %v1349, %v1347
    %v1372 = vpack.c.b16 %v1352, %v1350
    %v1373 = vpack.c.b16 %v1353, %v1351
    %v1374 = vpack.c.b16 %v1356, %v1354
    %v1375 = vpack.c.b16 %v1357, %v1355
    %v1376 = vpack.c.b16 %v1360, %v1358
    %v1377 = vpack.c.b16 %v1361, %v1359
    %1394 = vmatpush.bf16.msra.mxu0 %v1376
    %1395 = vmatpush.bf16.msra.mxu0 %v1374
    %1396 = vmatpush.bf16.msra.mxu0 %v1372
    %1397 = vmatpush.bf16.msra.mxu0 %v1370
    %1398 = vmatpush.bf16.msra.mxu0 %v1368
    %1399 = vmatpush.bf16.msra.mxu0 %v1366
    %1400 = vmatpush.bf16.msra.mxu0 %v1364
    %1401 = vmatpush.bf16.msra.mxu0 %v1362
    %1402 = vmatmul.bf16.gmra.mxu0 %v1291
    %v1403 = vpop.f32.mrf.mxu0
    %v1404 = vadd.f32 %v1310, %v1403
    %v1405 = vpop.f32.mrf.mxu0
    %v1406 = vadd.f32 %v1310, %v1405
    %1407 = vdwg.mxu0
    %1408 = vmatpush.bf16.msra.mxu0 %v1377
    %1409 = vmatpush.bf16.msra.mxu0 %v1375
    %1410 = vmatpush.bf16.msra.mxu0 %v1373
    %1411 = vmatpush.bf16.msra.mxu0 %v1371
    %1412 = vmatpush.bf16.msra.mxu0 %v1369
    %1413 = vmatpush.bf16.msra.mxu0 %v1367
    %1414 = vmatpush.bf16.msra.mxu0 %v1365
    %1415 = vmatpush.bf16.msra.mxu0 %v1363
    %1416 = vmatmul.bf16.gmra.mxu0 %v1291
    %v1417 = vpop.f32.mrf.mxu0
    %v1418 = vadd.f32 %v1311, %v1417
    %v1419 = vpop.f32.mrf.mxu0
    %v1420 = vadd.f32 %v1311, %v1419
    %1421 = vdwg.mxu0
    %v1422 = vld [vmem:[#allocation8] sm:$0x1]
    %v1423 = vld [vmem:[#allocation8 + $0x1] sm:$0x1]
    %1426 = vrot.lane.b32.xlu0 %v1287, 96
    %v1427 = vpop.permute.xlu0 %1426
    %1428 = vrot.lane.b32.xlu0 %v1289, 96
    %v1429 = vpop.permute.xlu0 %1428
    %1432 = vrot.lane.b32.xlu0 %v1287, 64
    %v1433 = vpop.permute.xlu0 %1432
    %1434 = vrot.lane.b32.xlu0 %v1289, 64
    %v1435 = vpop.permute.xlu0 %1434
    %1438 = vrot.lane.b32.xlu0 %v1287, 32
    %v1439 = vpop.permute.xlu0 %1438
    %1440 = vrot.lane.b32.xlu0 %v1289, 32
    %v1441 = vpop.permute.xlu0 %1440
    %v1444 = vpack.c.bf16 %v1287, %v1287
    %v1445 = vpack.c.bf16 %v1289, %v1289
    %v1446 = vpack.c.bf16 %v1427, %v1427
    %v1447 = vpack.c.bf16 %v1429, %v1429
    %v1448 = vpack.c.bf16 %v1433, %v1433
    %v1449 = vpack.c.bf16 %v1435, %v1435
    %v1450 = vpack.c.bf16 %v1439, %v1439
    %v1451 = vpack.c.bf16 %v1441, %v1441
    %1454 = vrot.lane.b32.xlu0 %v1404, 96
    %v1455 = vpop.permute.xlu0 %1454
    %1456 = vrot.lane.b32.xlu0 %v1406, 96
    %v1457 = vpop.permute.xlu0 %1456
    %1460 = vrot.lane.b32.xlu0 %v1404, 64
    %v1461 = vpop.permute.xlu0 %1460
    %1462 = vrot.lane.b32.xlu0 %v1406, 64
    %v1463 = vpop.permute.xlu0 %1462
    %1466 = vrot.lane.b32.xlu0 %v1404, 32
    %v1467 = vpop.permute.xlu0 %1466
    %1468 = vrot.lane.b32.xlu0 %v1406, 32
    %v1469 = vpop.permute.xlu0 %1468
    %v1472 = vpack.c.bf16 %v1404, %v1404
    %v1473 = vpack.c.bf16 %v1406, %v1406
    %v1474 = vpack.c.bf16 %v1455, %v1455
    %v1475 = vpack.c.bf16 %v1457, %v1457
    %v1476 = vpack.c.bf16 %v1461, %v1461
    %v1477 = vpack.c.bf16 %v1463, %v1463
    %v1478 = vpack.c.bf16 %v1467, %v1467
    %v1479 = vpack.c.bf16 %v1469, %v1469
    %1482 = vrot.lane.b32.xlu0 %v1418, 96
    %v1483 = vpop.permute.xlu0 %1482
    %1484 = vrot.lane.b32.xlu0 %v1420, 96
    %v1485 = vpop.permute.xlu0 %1484
    %1488 = vrot.lane.b32.xlu0 %v1418, 64
    %v1489 = vpop.permute.xlu0 %1488
    %1490 = vrot.lane.b32.xlu0 %v1420, 64
    %v1491 = vpop.permute.xlu0 %1490
    %1494 = vrot.lane.b32.xlu0 %v1418, 32
    %v1495 = vpop.permute.xlu0 %1494
    %1496 = vrot.lane.b32.xlu0 %v1420, 32
    %v1497 = vpop.permute.xlu0 %1496
    %v1500 = vpack.c.bf16 %v1418, %v1418
    %v1501 = vpack.c.bf16 %v1420, %v1420
    %v1502 = vpack.c.bf16 %v1483, %v1483
    %v1503 = vpack.c.bf16 %v1485, %v1485
    %v1504 = vpack.c.bf16 %v1489, %v1489
    %v1505 = vpack.c.bf16 %v1491, %v1491
    %v1506 = vpack.c.bf16 %v1495, %v1495
    %v1507 = vpack.c.bf16 %v1497, %v1497
    %v1509 = vsel %vm599, %v1444, 0
    %v1512 = vsel %vm599, %v1472, 0
    %1514 = vmatpush.bf16.xpose.msra.mxu0 0
    %1515 = vmatpush.bf16.xpose.msra.mxu0 0
    %1516 = vmatpush.bf16.xpose.msra.mxu0 0
    %1517 = vmatpush.bf16.xpose.msra.mxu0 0
    %1518 = vmatpush.bf16.xpose.msra.mxu0 0
    %1519 = vmatpush.bf16.xpose.msra.mxu0 0
    %1520 = vmatpush.bf16.xpose.msra.mxu0 0
    %1521 = vmatpush.bf16.xpose.msra.mxu0 %v1512
    %1522 = vmatmul.bf16.gmra.mxu0 %v1509
    %v1523 = vpop.f32.mrf.mxu0
    %v1524 = vadd.f32 0.0, %v1523
    %v1525 = vpop.f32.mrf.mxu0
    %1526 = vdwg.mxu0
    %v1528 = vsel %vm599, %v1445, 0
    %v1531 = vsel %vm599, %v1473, 0
    %1533 = vmatpush.bf16.xpose.msra.mxu0 0
    %1534 = vmatpush.bf16.xpose.msra.mxu0 0
    %1535 = vmatpush.bf16.xpose.msra.mxu0 0
    %1536 = vmatpush.bf16.xpose.msra.mxu0 0
    %1537 = vmatpush.bf16.xpose.msra.mxu0 0
    %1538 = vmatpush.bf16.xpose.msra.mxu0 0
    %1539 = vmatpush.bf16.xpose.msra.mxu0 0
    %1540 = vmatpush.bf16.xpose.msra.mxu0 %v1531
    %1541 = vmatmul.bf16.gmra.mxu0 %v1528
    %v1542 = vpop.f32.mrf.mxu0
    %v1543 = vadd.f32 0.0, %v1542
    %v1544 = vpop.f32.mrf.mxu0
    %1545 = vdwg.mxu0
    %v1547 = vsel %vm599, %v1446, 0
    %v1550 = vsel %vm599, %v1474, 0
    %1552 = vmatpush.bf16.xpose.msra.mxu0 0
    %1553 = vmatpush.bf16.xpose.msra.mxu0 0
    %1554 = vmatpush.bf16.xpose.msra.mxu0 0
    %1555 = vmatpush.bf16.xpose.msra.mxu0 0
    %1556 = vmatpush.bf16.xpose.msra.mxu0 0
    %1557 = vmatpush.bf16.xpose.msra.mxu0 0
    %1558 = vmatpush.bf16.xpose.msra.mxu0 0
    %1559 = vmatpush.bf16.xpose.msra.mxu0 %v1550
    %1560 = vmatmul.bf16.gmra.mxu0 %v1547
    %v1561 = vpop.f32.mrf.mxu0
    %v1562 = vadd.f32 0.0, %v1561
    %v1563 = vpop.f32.mrf.mxu0
    %1564 = vdwg.mxu0
    %v1566 = vsel %vm599, %v1447, 0
    %v1569 = vsel %vm599, %v1475, 0
    %1571 = vmatpush.bf16.xpose.msra.mxu0 0
    %1572 = vmatpush.bf16.xpose.msra.mxu0 0
    %1573 = vmatpush.bf16.xpose.msra.mxu0 0
    %1574 = vmatpush.bf16.xpose.msra.mxu0 0
    %1575 = vmatpush.bf16.xpose.msra.mxu0 0
    %1576 = vmatpush.bf16.xpose.msra.mxu0 0
    %1577 = vmatpush.bf16.xpose.msra.mxu0 0
    %1578 = vmatpush.bf16.xpose.msra.mxu0 %v1569
    %1579 = vmatmul.bf16.gmra.mxu0 %v1566
    %v1580 = vpop.f32.mrf.mxu0
    %v1581 = vadd.f32 0.0, %v1580
    %v1582 = vpop.f32.mrf.mxu0
    %1583 = vdwg.mxu0
    %v1585 = vsel %vm599, %v1448, 0
    %v1588 = vsel %vm599, %v1476, 0
    %1590 = vmatpush.bf16.xpose.msra.mxu0 0
    %1591 = vmatpush.bf16.xpose.msra.mxu0 0
    %1592 = vmatpush.bf16.xpose.msra.mxu0 0
    %1593 = vmatpush.bf16.xpose.msra.mxu0 0
    %1594 = vmatpush.bf16.xpose.msra.mxu0 0
    %1595 = vmatpush.bf16.xpose.msra.mxu0 0
    %1596 = vmatpush.bf16.xpose.msra.mxu0 0
    %1597 = vmatpush.bf16.xpose.msra.mxu0 %v1588
    %1598 = vmatmul.bf16.gmra.mxu0 %v1585
    %v1599 = vpop.f32.mrf.mxu0
    %v1600 = vadd.f32 0.0, %v1599
    %v1601 = vpop.f32.mrf.mxu0
    %1602 = vdwg.mxu0
    %v1604 = vsel %vm599, %v1449, 0
    %v1607 = vsel %vm599, %v1477, 0
    %1609 = vmatpush.bf16.xpose.msra.mxu0 0
    %1610 = vmatpush.bf16.xpose.msra.mxu0 0
    %1611 = vmatpush.bf16.xpose.msra.mxu0 0
    %1612 = vmatpush.bf16.xpose.msra.mxu0 0
    %1613 = vmatpush.bf16.xpose.msra.mxu0 0
    %1614 = vmatpush.bf16.xpose.msra.mxu0 0
    %1615 = vmatpush.bf16.xpose.msra.mxu0 0
    %1616 = vmatpush.bf16.xpose.msra.mxu0 %v1607
    %1617 = vmatmul.bf16.gmra.mxu0 %v1604
    %v1618 = vpop.f32.mrf.mxu0
    %v1619 = vadd.f32 0.0, %v1618
    %v1620 = vpop.f32.mrf.mxu0
    %1621 = vdwg.mxu0
    %v1623 = vsel %vm599, %v1450, 0
    %v1626 = vsel %vm599, %v1478, 0
    %1628 = vmatpush.bf16.xpose.msra.mxu0 0
    %1629 = vmatpush.bf16.xpose.msra.mxu0 0
    %1630 = vmatpush.bf16.xpose.msra.mxu0 0
    %1631 = vmatpush.bf16.xpose.msra.mxu0 0
    %1632 = vmatpush.bf16.xpose.msra.mxu0 0
    %1633 = vmatpush.bf16.xpose.msra.mxu0 0
    %1634 = vmatpush.bf16.xpose.msra.mxu0 0
    %1635 = vmatpush.bf16.xpose.msra.mxu0 %v1626
    %1636 = vmatmul.bf16.gmra.mxu0 %v1623
    %v1637 = vpop.f32.mrf.mxu0
    %v1638 = vadd.f32 0.0, %v1637
    %v1639 = vpop.f32.mrf.mxu0
    %1640 = vdwg.mxu0
    %v1642 = vsel %vm599, %v1451, 0
    %v1645 = vsel %vm599, %v1479, 0
    %1647 = vmatpush.bf16.xpose.msra.mxu0 0
    %1648 = vmatpush.bf16.xpose.msra.mxu0 0
    %1649 = vmatpush.bf16.xpose.msra.mxu0 0
    %1650 = vmatpush.bf16.xpose.msra.mxu0 0
    %1651 = vmatpush.bf16.xpose.msra.mxu0 0
    %1652 = vmatpush.bf16.xpose.msra.mxu0 0
    %1653 = vmatpush.bf16.xpose.msra.mxu0 0
    %1654 = vmatpush.bf16.xpose.msra.mxu0 %v1645
    %1655 = vmatmul.bf16.gmra.mxu0 %v1642
    %v1656 = vpop.f32.mrf.mxu0
    %v1657 = vadd.f32 0.0, %v1656
    %v1658 = vpop.f32.mrf.mxu0
    %1659 = vdwg.mxu0
    %v1660 = vmul.f32 %v1524, 0.17677669
    %v1661 = vmul.f32 %v1543, 0.17677669
    %v1662 = vmul.f32 %v1562, 0.17677669
    %v1663 = vmul.f32 %v1581, 0.17677669
    %v1664 = vmul.f32 %v1600, 0.17677669
    %v1665 = vmul.f32 %v1619, 0.17677669
    %v1666 = vmul.f32 %v1638, 0.17677669
    %v1667 = vmul.f32 %v1657, 0.17677669
    %v1670 = vperm.slane %v1422, 0
    %v1671 = vperm.slane %v1423, 0
    %v1674 = vadd.f32 %v1660, %v1670
    %v1675 = vadd.f32 %v1661, %v1671
    %v1676 = vadd.f32 %v1662, %v1670
    %v1677 = vadd.f32 %v1663, %v1671
    %v1678 = vadd.f32 %v1664, %v1670
    %v1679 = vadd.f32 %v1665, %v1671
    %v1680 = vadd.f32 %v1666, %v1670
    %v1681 = vadd.f32 %v1667, %v1671
    %v1682 = vsel %vm776, %v1674, -inf
    %1683 = vmax.xlane.f32.xlu0 %v1682
    %v1684 = vpop.xlane.xlu0 %1683
    %v1685 = vsel %vm776, %v1675, -inf
    %1686 = vmax.xlane.f32.xlu0 %v1685
    %v1687 = vpop.xlane.xlu0 %1686
    %v1688 = vsel %vm776, %v1676, -inf
    %1689 = vmax.xlane.f32.xlu0 %v1688
    %v1690 = vpop.xlane.xlu0 %1689
    %v1691 = vsel %vm776, %v1677, -inf
    %1692 = vmax.xlane.f32.xlu0 %v1691
    %v1693 = vpop.xlane.xlu0 %1692
    %v1694 = vsel %vm776, %v1678, -inf
    %1695 = vmax.xlane.f32.xlu0 %v1694
    %v1696 = vpop.xlane.xlu0 %1695
    %v1697 = vsel %vm776, %v1679, -inf
    %1698 = vmax.xlane.f32.xlu0 %v1697
    %v1699 = vpop.xlane.xlu0 %1698
    %v1700 = vsel %vm776, %v1680, -inf
    %1701 = vmax.xlane.f32.xlu0 %v1700
    %v1702 = vpop.xlane.xlu0 %1701
    %v1703 = vsel %vm776, %v1681, -inf
    %1704 = vmax.xlane.f32.xlu0 %v1703
    %v1705 = vpop.xlane.xlu0 %1704
    %v1706 = vsub.f32 %v1674, %v1684
    %v1707 = vsub.f32 %v1675, %v1687
    %v1708 = vsub.f32 %v1676, %v1690
    %v1709 = vsub.f32 %v1677, %v1693
    %v1710 = vsub.f32 %v1678, %v1696
    %v1711 = vsub.f32 %v1679, %v1699
    %v1712 = vsub.f32 %v1680, %v1702
    %v1713 = vsub.f32 %v1681, %v1705
    %v1714 = vmul.f32 %v1706, 1.442695
    %v1715 = vpow.pop %v1714
    %v1716 = vmul.f32 %v1707, 1.442695
    %v1717 = vpow.pop %v1716
    %v1718 = vmul.f32 %v1708, 1.442695
    %v1719 = vpow.pop %v1718
    %v1720 = vmul.f32 %v1709, 1.442695
    %v1721 = vpow.pop %v1720
    %v1722 = vmul.f32 %v1710, 1.442695
    %v1723 = vpow.pop %v1722
    %v1724 = vmul.f32 %v1711, 1.442695
    %v1725 = vpow.pop %v1724
    %v1726 = vmul.f32 %v1712, 1.442695
    %v1727 = vpow.pop %v1726
    %v1728 = vmul.f32 %v1713, 1.442695
    %v1729 = vpow.pop %v1728
    %v1730 = vsel %vm776, %v1715, 0.0
    %1731 = vadd.xlane.f32.xlu0 %v1730
    %v1732 = vpop.xlane.xlu0 %1731
    %v1733 = vsel %vm776, %v1717, 0.0
    %1734 = vadd.xlane.f32.xlu0 %v1733
    %v1735 = vpop.xlane.xlu0 %1734
    %v1736 = vsel %vm776, %v1719, 0.0
    %1737 = vadd.xlane.f32.xlu0 %v1736
    %v1738 = vpop.xlane.xlu0 %1737
    %v1739 = vsel %vm776, %v1721, 0.0
    %1740 = vadd.xlane.f32.xlu0 %v1739
    %v1741 = vpop.xlane.xlu0 %1740
    %v1742 = vsel %vm776, %v1723, 0.0
    %1743 = vadd.xlane.f32.xlu0 %v1742
    %v1744 = vpop.xlane.xlu0 %1743
    %v1745 = vsel %vm776, %v1725, 0.0
    %1746 = vadd.xlane.f32.xlu0 %v1745
    %v1747 = vpop.xlane.xlu0 %1746
    %v1748 = vsel %vm776, %v1727, 0.0
    %1749 = vadd.xlane.f32.xlu0 %v1748
    %v1750 = vpop.xlane.xlu0 %1749
    %v1751 = vsel %vm776, %v1729, 0.0
    %1752 = vadd.xlane.f32.xlu0 %v1751
    %v1753 = vpop.xlane.xlu0 %1752
    %v1754 = vrcp.pop %v1732
    %v1755 = vrcp.pop %v1735
    %v1756 = vrcp.pop %v1738
    %v1757 = vrcp.pop %v1741
    %v1758 = vrcp.pop %v1744
    %v1759 = vrcp.pop %v1747
    %v1760 = vrcp.pop %v1750
    %v1761 = vrcp.pop %v1753
    %v1762 = vmul.f32 %v1715, %v1754
    %v1763 = vmul.f32 %v1717, %v1755
    %v1764 = vmul.f32 %v1719, %v1756
    %v1765 = vmul.f32 %v1721, %v1757
    %v1766 = vmul.f32 %v1723, %v1758
    %v1767 = vmul.f32 %v1725, %v1759
    %v1768 = vmul.f32 %v1727, %v1760
    %v1769 = vmul.f32 %v1729, %v1761
    %v1770 = vpack.c.bf16 %v1762, %v1762
    %v1771 = vpack.c.bf16 %v1763, %v1763
    %v1772 = vpack.c.bf16 %v1764, %v1764
    %v1773 = vpack.c.bf16 %v1765, %v1765
    %v1774 = vpack.c.bf16 %v1766, %v1766
    %v1775 = vpack.c.bf16 %v1767, %v1767
    %v1776 = vpack.c.bf16 %v1768, %v1768
    %v1777 = vpack.c.bf16 %v1769, %v1769
    %v1779 = vsel %vm776, %v1770, 0
    %v1782 = vsel %vm876, %v1500, 0
    %1784 = vmatpush.bf16.msra.mxu0 0
    %1785 = vmatpush.bf16.msra.mxu0 0
    %1786 = vmatpush.bf16.msra.mxu0 0
    %1787 = vmatpush.bf16.msra.mxu0 0
    %1788 = vmatpush.bf16.msra.mxu0 0
    %1789 = vmatpush.bf16.msra.mxu0 0
    %1790 = vmatpush.bf16.msra.mxu0 0
    %1791 = vmatpush.bf16.msra.mxu0 %v1782
    %1792 = vmatmul.bf16.gmra.mxu0 %v1779
    %v1793 = vpop.f32.mrf.mxu0
    %v1794 = vadd.f32 0.0, %v1793
    %v1795 = vpop.f32.mrf.mxu0
    %1796 = vdwg.mxu0
    %v1798 = vsel %vm776, %v1771, 0
    %v1801 = vsel %vm876, %v1501, 0
    %1803 = vmatpush.bf16.msra.mxu0 0
    %1804 = vmatpush.bf16.msra.mxu0 0
    %1805 = vmatpush.bf16.msra.mxu0 0
    %1806 = vmatpush.bf16.msra.mxu0 0
    %1807 = vmatpush.bf16.msra.mxu0 0
    %1808 = vmatpush.bf16.msra.mxu0 0
    %1809 = vmatpush.bf16.msra.mxu0 0
    %1810 = vmatpush.bf16.msra.mxu0 %v1801
    %1811 = vmatmul.bf16.gmra.mxu0 %v1798
    %v1812 = vpop.f32.mrf.mxu0
    %v1813 = vadd.f32 0.0, %v1812
    %v1814 = vpop.f32.mrf.mxu0
    %1815 = vdwg.mxu0
    %v1817 = vsel %vm776, %v1772, 0
    %v1820 = vsel %vm876, %v1502, 0
    %1822 = vmatpush.bf16.msra.mxu0 0
    %1823 = vmatpush.bf16.msra.mxu0 0
    %1824 = vmatpush.bf16.msra.mxu0 0
    %1825 = vmatpush.bf16.msra.mxu0 0
    %1826 = vmatpush.bf16.msra.mxu0 0
    %1827 = vmatpush.bf16.msra.mxu0 0
    %1828 = vmatpush.bf16.msra.mxu0 0
    %1829 = vmatpush.bf16.msra.mxu0 %v1820
    %1830 = vmatmul.bf16.gmra.mxu0 %v1817
    %v1831 = vpop.f32.mrf.mxu0
    %v1832 = vadd.f32 0.0, %v1831
    %v1833 = vpop.f32.mrf.mxu0
    %1834 = vdwg.mxu0
    %v1836 = vsel %vm776, %v1773, 0
    %v1839 = vsel %vm876, %v1503, 0
    %1841 = vmatpush.bf16.msra.mxu0 0
    %1842 = vmatpush.bf16.msra.mxu0 0
    %1843 = vmatpush.bf16.msra.mxu0 0
    %1844 = vmatpush.bf16.msra.mxu0 0
    %1845 = vmatpush.bf16.msra.mxu0 0
    %1846 = vmatpush.bf16.msra.mxu0 0
    %1847 = vmatpush.bf16.msra.mxu0 0
    %1848 = vmatpush.bf16.msra.mxu0 %v1839
    %1849 = vmatmul.bf16.gmra.mxu0 %v1836
    %v1850 = vpop.f32.mrf.mxu0
    %v1851 = vadd.f32 0.0, %v1850
    %v1852 = vpop.f32.mrf.mxu0
    %1853 = vdwg.mxu0
    %v1855 = vsel %vm776, %v1774, 0
    %v1858 = vsel %vm876, %v1504, 0
    %1860 = vmatpush.bf16.msra.mxu0 0
    %1861 = vmatpush.bf16.msra.mxu0 0
    %1862 = vmatpush.bf16.msra.mxu0 0
    %1863 = vmatpush.bf16.msra.mxu0 0
    %1864 = vmatpush.bf16.msra.mxu0 0
    %1865 = vmatpush.bf16.msra.mxu0 0
    %1866 = vmatpush.bf16.msra.mxu0 0
    %1867 = vmatpush.bf16.msra.mxu0 %v1858
    %1868 = vmatmul.bf16.gmra.mxu0 %v1855
    %v1869 = vpop.f32.mrf.mxu0
    %v1870 = vadd.f32 0.0, %v1869
    %v1871 = vpop.f32.mrf.mxu0
    %1872 = vdwg.mxu0
    %v1874 = vsel %vm776, %v1775, 0
    %v1877 = vsel %vm876, %v1505, 0
    %1879 = vmatpush.bf16.msra.mxu0 0
    %1880 = vmatpush.bf16.msra.mxu0 0
    %1881 = vmatpush.bf16.msra.mxu0 0
    %1882 = vmatpush.bf16.msra.mxu0 0
    %1883 = vmatpush.bf16.msra.mxu0 0
    %1884 = vmatpush.bf16.msra.mxu0 0
    %1885 = vmatpush.bf16.msra.mxu0 0
    %1886 = vmatpush.bf16.msra.mxu0 %v1877
    %1887 = vmatmul.bf16.gmra.mxu0 %v1874
    %v1888 = vpop.f32.mrf.mxu0
    %v1889 = vadd.f32 0.0, %v1888
    %v1890 = vpop.f32.mrf.mxu0
    %1891 = vdwg.mxu0
    %v1893 = vsel %vm776, %v1776, 0
    %v1896 = vsel %vm876, %v1506, 0
    %1898 = vmatpush.bf16.msra.mxu0 0
    %1899 = vmatpush.bf16.msra.mxu0 0
    %1900 = vmatpush.bf16.msra.mxu0 0
    %1901 = vmatpush.bf16.msra.mxu0 0
    %1902 = vmatpush.bf16.msra.mxu0 0
    %1903 = vmatpush.bf16.msra.mxu0 0
    %1904 = vmatpush.bf16.msra.mxu0 0
    %1905 = vmatpush.bf16.msra.mxu0 %v1896
    %1906 = vmatmul.bf16.gmra.mxu0 %v1893
    %v1907 = vpop.f32.mrf.mxu0
    %v1908 = vadd.f32 0.0, %v1907
    %v1909 = vpop.f32.mrf.mxu0
    %1910 = vdwg.mxu0
    %v1912 = vsel %vm776, %v1777, 0
    %v1915 = vsel %vm876, %v1507, 0
    %1917 = vmatpush.bf16.msra.mxu0 0
    %1918 = vmatpush.bf16.msra.mxu0 0
    %1919 = vmatpush.bf16.msra.mxu0 0
    %1920 = vmatpush.bf16.msra.mxu0 0
    %1921 = vmatpush.bf16.msra.mxu0 0
    %1922 = vmatpush.bf16.msra.mxu0 0
    %1923 = vmatpush.bf16.msra.mxu0 0
    %1924 = vmatpush.bf16.msra.mxu0 %v1915
    %1925 = vmatmul.bf16.gmra.mxu0 %v1912
    %v1926 = vpop.f32.mrf.mxu0
    %v1927 = vadd.f32 0.0, %v1926
    %v1928 = vpop.f32.mrf.mxu0
    %1929 = vdwg.mxu0
    %1932 = vrot.lane.b32.xlu0 %v1832, 32
    %v1933 = vpop.permute.xlu0 %1932
    %1934 = vrot.lane.b32.xlu0 %v1851, 32
    %v1935 = vpop.permute.xlu0 %1934
    %1940 = vrot.lane.b32.xlu0 %v1870, 64
    %v1941 = vpop.permute.xlu0 %1940
    %1942 = vrot.lane.b32.xlu0 %v1889, 64
    %v1943 = vpop.permute.xlu0 %1942
    %1948 = vrot.lane.b32.xlu0 %v1908, 96
    %v1949 = vpop.permute.xlu0 %1948
    %1950 = vrot.lane.b32.xlu0 %v1927, 96
    %v1951 = vpop.permute.xlu0 %1950
    %v1954 = vsel %vm599, %v1794, %v1933
    %v1955 = vsel %vm599, %v1813, %v1935
    %v1956 = vsel %vm1052, %v1954, %v1941
    %v1957 = vsel %vm1052, %v1955, %v1943
    %v1958 = vsel %vm1055, %v1956, %v1949
    %v1959 = vsel %vm1055, %v1957, %v1951
    %v1960 = vpack.c.bf16 %v1959, %v1958
    %v1961 = vld [vmem:[#allocation20] sm:$0xf]
    %v1962 = vld [vmem:[#allocation20 + $0x4] sm:$0xf]
    %v1963 = vld [vmem:[#allocation20 + $0x8] sm:$0xf]
    %v1964 = vld [vmem:[#allocation20 + $0xc] sm:$0xf]
    %v1965 = vld [vmem:[#allocation20 + $0x10] sm:$0xf]
    %v1966 = vld [vmem:[#allocation20 + $0x14] sm:$0xf]
    %v1967 = vld [vmem:[#allocation20 + $0x18] sm:$0xf]
    %v1968 = vld [vmem:[#allocation20 + $0x1c] sm:$0xf]
    %v1969 = vld [vmem:[#allocation20 + $0x20] sm:$0xf]
    %v1970 = vld [vmem:[#allocation20 + $0x24] sm:$0xf]
    %v1971 = vld [vmem:[#allocation20 + $0x28] sm:$0xf]
    %v1972 = vld [vmem:[#allocation20 + $0x2c] sm:$0xf]
    %v1973 = vld [vmem:[#allocation20 + $0x30] sm:$0xf]
    %v1974 = vld [vmem:[#allocation20 + $0x34] sm:$0xf]
    %v1975 = vld [vmem:[#allocation20 + $0x38] sm:$0xf]
    %v1976 = vld [vmem:[#allocation20 + $0x3c] sm:$0xf]
    %v1977 = vld [vmem:[%s15] sm:$0x1]
    %v1979 = vperm.slane %v1977, 0
    %v1997 = vunpack.c.l.b16 %v1961
    %v1998 = vunpack.c.l.b16 %v1962
    %v1999 = vunpack.c.l.b16 %v1963
    %v2000 = vunpack.c.l.b16 %v1964
    %v2001 = vunpack.c.l.b16 %v1965
    %v2002 = vunpack.c.l.b16 %v1966
    %v2003 = vunpack.c.l.b16 %v1967
    %v2004 = vunpack.c.l.b16 %v1968
    %v2005 = vunpack.c.l.b16 %v1969
    %v2006 = vunpack.c.l.b16 %v1970
    %v2007 = vunpack.c.l.b16 %v1971
    %v2008 = vunpack.c.l.b16 %v1972
    %v2009 = vunpack.c.l.b16 %v1973
    %v2010 = vunpack.c.l.b16 %v1974
    %v2011 = vunpack.c.l.b16 %v1975
    %v2012 = vunpack.c.l.b16 %v1976
    %v2013 = vpack.c.b16 %v1998, %v1997
    %v2014 = vpack.c.b16 %v2000, %v1999
    %v2015 = vpack.c.b16 %v2002, %v2001
    %v2016 = vpack.c.b16 %v2004, %v2003
    %v2017 = vpack.c.b16 %v2006, %v2005
    %v2018 = vpack.c.b16 %v2008, %v2007
    %v2019 = vpack.c.b16 %v2010, %v2009
    %v2020 = vpack.c.b16 %v2012, %v2011
    %2029 = vmatpush.bf16.msra.mxu0 %v2020
    %2030 = vmatpush.bf16.msra.mxu0 %v2019
    %2031 = vmatpush.bf16.msra.mxu0 %v2018
    %2032 = vmatpush.bf16.msra.mxu0 %v2017
    %2033 = vmatpush.bf16.msra.mxu0 %v2016
    %2034 = vmatpush.bf16.msra.mxu0 %v2015
    %2035 = vmatpush.bf16.msra.mxu0 %v2014
    %2036 = vmatpush.bf16.msra.mxu0 %v2013
    %2037 = vmatmul.bf16.gmra.mxu0 %v1960
    %v2038 = vpop.f32.mrf.mxu0
    %v2039 = vadd.f32 %v1979, %v2038
    %v2040 = vpop.f32.mrf.mxu0
    %v2041 = vadd.f32 %v1979, %v2040
    %2042 = vdwg.mxu0
    %v2043 = vadd.f32 %v2039, %v1206
    %v2044 = vadd.f32 %v2041, %v1207
    %v2045 = vld [vmem:[%s16] sm:$0x1]
    %v2046 = vld [vmem:[%s17] sm:$0x1]
    %2047 = vadd.xlane.f32.xlu0 %v2043
    %v2048 = vpop.xlane.xlu0 %2047
    %2049 = vadd.xlane.f32.xlu0 %v2044
    %v2050 = vpop.xlane.xlu0 %2049
    %v2051 = vmul.f32 %v2048, %v1155
    %v2052 = vmul.f32 %v2050, %v1155
    %v2053 = vmul.f32 %v2043, %v2043
    %v2054 = vmul.f32 %v2044, %v2044
    %2055 = vadd.xlane.f32.xlu0 %v2053
    %v2056 = vpop.xlane.xlu0 %2055
    %2057 = vadd.xlane.f32.xlu0 %v2054
    %v2058 = vpop.xlane.xlu0 %2057
    %v2059 = vmul.f32 %v2056, %v1155
    %v2060 = vmul.f32 %v2058, %v1155
    %v2061 = vmul.f32 %v2051, %v2051
    %v2062 = vmul.f32 %v2052, %v2052
    %v2063 = vsub.f32 %v2059, %v2061
    %v2064 = vsub.f32 %v2060, %v2062
    %v2065 = vmax.f32 %v2063, 0.0
    %v2066 = vmax.f32 %v2064, 0.0
    %v2067 = vsub.f32 %v2043, %v2051
    %v2068 = vsub.f32 %v2044, %v2052
    %v2069 = vadd.f32 %v2065, 1e-05
    %v2070 = vadd.f32 %v2066, 1e-05
    %v2071 = vrsqrt.pop %v2069
    %v2072 = vmul.f32 %v2071, %v2069
    %v2073 = vmul.f32 %v2072, %v2071
    %v2074 = vmul.f32 0.5, %v2073
    %v2075 = vsub.f32 1.5, %v2074
    %v2076 = vmul.f32 %v2071, %v2075
    %vm2077 = vweird.f32 %v2069
    %vm2078 = vweird.f32 %v2071
    %vm2079 = vmor %vm2077, %vm2078
    %v2080 = vsel %vm2079, %v2071, %v2076
    %v2081 = vrsqrt.pop %v2070
    %v2082 = vmul.f32 %v2081, %v2070
    %v2083 = vmul.f32 %v2082, %v2081
    %v2084 = vmul.f32 0.5, %v2083
    %v2085 = vsub.f32 1.5, %v2084
    %v2086 = vmul.f32 %v2081, %v2085
    %vm2087 = vweird.f32 %v2070
    %vm2088 = vweird.f32 %v2081
    %vm2089 = vmor %vm2087, %vm2088
    %v2090 = vsel %vm2089, %v2081, %v2086
    %v2091 = vmul.f32 %v2067, %v2080
    %v2092 = vmul.f32 %v2068, %v2090
    %v2094 = vperm.slane %v2045, 0
    %v2096 = vmul.f32 %v2091, %v2094
    %v2097 = vmul.f32 %v2092, %v2094
    %v2099 = vperm.slane %v2046, 0
    %v2101 = vadd.f32 %v2096, %v2099
    %v2102 = vadd.f32 %v2097, %v2099
    %v2103 = vpack.c.bf16 %v2102, %v2101
    %v2104 = vld [vmem:[#allocation22] sm:$0xff]
    %v2105 = vld [vmem:[#allocation22 + $0x8] sm:$0xff]
    %v2106 = vld [vmem:[#allocation22 + $0x10] sm:$0xff]
    %v2107 = vld [vmem:[#allocation22 + $0x18] sm:$0xff]
    %v2108 = vld [vmem:[#allocation22 + $0x20] sm:$0xff]
    %v2109 = vld [vmem:[#allocation22 + $0x28] sm:$0xff]
    %v2110 = vld [vmem:[#allocation22 + $0x30] sm:$0xff]
    %v2111 = vld [vmem:[#allocation22 + $0x38] sm:$0xff]
    %v2112 = vld [vmem:[#allocation22 + $0x40] sm:$0xff]
    %v2113 = vld [vmem:[#allocation22 + $0x48] sm:$0xff]
    %v2114 = vld [vmem:[#allocation22 + $0x50] sm:$0xff]
    %v2115 = vld [vmem:[#allocation22 + $0x58] sm:$0xff]
    %v2116 = vld [vmem:[#allocation22 + $0x60] sm:$0xff]
    %v2117 = vld [vmem:[#allocation22 + $0x68] sm:$0xff]
    %v2118 = vld [vmem:[#allocation22 + $0x70] sm:$0xff]
    %v2119 = vld [vmem:[#allocation22 + $0x78] sm:$0xff]
    %v2120 = vld [vmem:[%s19] sm:$0x3]
    %v2122 = vperm.slane %v2120, 0
    %v2123 = vperm.slane %v2120, 1
    %v2142 = vunpack.c.l.b16 %v2104
    %v2143 = vunpack.c.h.b16 %v2104
    %v2144 = vunpack.c.l.b16 %v2105
    %v2145 = vunpack.c.h.b16 %v2105
    %v2146 = vunpack.c.l.b16 %v2106
    %v2147 = vunpack.c.h.b16 %v2106
    %v2148 = vunpack.c.l.b16 %v2107
    %v2149 = vunpack.c.h.b16 %v2107
    %v2150 = vunpack.c.l.b16 %v2108
    %v2151 = vunpack.c.h.b16 %v2108
    %v2152 = vunpack.c.l.b16 %v2109
    %v2153 = vunpack.c.h.b16 %v2109
    %v2154 = vunpack.c.l.b16 %v2110
    %v2155 = vunpack.c.h.b16 %v2110
    %v2156 = vunpack.c.l.b16 %v2111
    %v2157 = vunpack.c.h.b16 %v2111
    %v2158 = vunpack.c.l.b16 %v2112
    %v2159 = vunpack.c.h.b16 %v2112
    %v2160 = vunpack.c.l.b16 %v2113
    %v2161 = vunpack.c.h.b16 %v2113
    %v2162 = vunpack.c.l.b16 %v2114
    %v2163 = vunpack.c.h.b16 %v2114
    %v2164 = vunpack.c.l.b16 %v2115
    %v2165 = vunpack.c.h.b16 %v2115
    %v2166 = vunpack.c.l.b16 %v2116
    %v2167 = vunpack.c.h.b16 %v2116
    %v2168 = vunpack.c.l.b16 %v2117
    %v2169 = vunpack.c.h.b16 %v2117
    %v2170 = vunpack.c.l.b16 %v2118
    %v2171 = vunpack.c.h.b16 %v2118
    %v2172 = vunpack.c.l.b16 %v2119
    %v2173 = vunpack.c.h.b16 %v2119
    %v2174 = vpack.c.b16 %v2144, %v2142
    %v2175 = vpack.c.b16 %v2145, %v2143
    %v2176 = vpack.c.b16 %v2148, %v2146
    %v2177 = vpack.c.b16 %v2149, %v2147
    %v2178 = vpack.c.b16 %v2152, %v2150
    %v2179 = vpack.c.b16 %v2153, %v2151
    %v2180 = vpack.c.b16 %v2156, %v2154
    %v2181 = vpack.c.b16 %v2157, %v2155
    %v2182 = vpack.c.b16 %v2160, %v2158
    %v2183 = vpack.c.b16 %v2161, %v2159
    %v2184 = vpack.c.b16 %v2164, %v2162
    %v2185 = vpack.c.b16 %v2165, %v2163
    %v2186 = vpack.c.b16 %v2168, %v2166
    %v2187 = vpack.c.b16 %v2169, %v2167
    %v2188 = vpack.c.b16 %v2172, %v2170
    %v2189 = vpack.c.b16 %v2173, %v2171
    %2206 = vmatpush.bf16.msra.mxu0 %v2188
    %2207 = vmatpush.bf16.msra.mxu0 %v2186
    %2208 = vmatpush.bf16.msra.mxu0 %v2184
    %2209 = vmatpush.bf16.msra.mxu0 %v2182
    %2210 = vmatpush.bf16.msra.mxu0 %v2180
    %2211 = vmatpush.bf16.msra.mxu0 %v2178
    %2212 = vmatpush.bf16.msra.mxu0 %v2176
    %2213 = vmatpush.bf16.msra.mxu0 %v2174
    %2214 = vmatmul.bf16.gmra.mxu0 %v2103
    %v2215 = vpop.f32.mrf.mxu0
    %v2216 = vadd.f32 %v2122, %v2215
    %v2217 = vpop.f32.mrf.mxu0
    %v2218 = vadd.f32 %v2122, %v2217
    %2219 = vdwg.mxu0
    %2220 = vmatpush.bf16.msra.mxu0 %v2189
    %2221 = vmatpush.bf16.msra.mxu0 %v2187
    %2222 = vmatpush.bf16.msra.mxu0 %v2185
    %2223 = vmatpush.bf16.msra.mxu0 %v2183
    %2224 = vmatpush.bf16.msra.mxu0 %v2181
    %2225 = vmatpush.bf16.msra.mxu0 %v2179
    %2226 = vmatpush.bf16.msra.mxu0 %v2177
    %2227 = vmatpush.bf16.msra.mxu0 %v2175
    %2228 = vmatmul.bf16.gmra.mxu0 %v2103
    %v2229 = vpop.f32.mrf.mxu0
    %v2230 = vadd.f32 %v2123, %v2229
    %v2231 = vpop.f32.mrf.mxu0
    %v2232 = vadd.f32 %v2123, %v2231
    %2233 = vdwg.mxu0
    %v2234 = vmax.f32 %v2216, 0.0
    %v2235 = vmax.f32 %v2230, 0.0
    %v2236 = vmax.f32 %v2218, 0.0
    %v2237 = vmax.f32 %v2232, 0.0
    %v2238 = vld [vmem:[%s20] sm:$0x3]
    %v2239 = vld [vmem:[%s21] sm:$0x3]
    %v2240 = vadd.f32 %v2234, %v2235
    %2241 = vadd.xlane.f32.xlu0 %v2240
    %v2242 = vpop.xlane.xlu0 %2241
    %v2243 = vadd.f32 %v2236, %v2237
    %2244 = vadd.xlane.f32.xlu0 %v2243
    %v2245 = vpop.xlane.xlu0 %2244
    %v2246 = vrcp.pop 256.0
    %v2247 = vmul.f32 256.0, %v2246
    %v2248 = vsub.f32 1.0, %v2247
    %v2249 = vmul.f32 %v2246, %v2248
    %v2250 = vadd.f32 %v2246, %v2249
    %vm2251 = vweird.f32 %v2246
    %v2252 = vsel %vm2251, %v2246, %v2250
    %v2253 = vmul.f32 %v2242, %v2252
    %v2254 = vmul.f32 %v2245, %v2252
    %v2255 = vmul.f32 %v2234, %v2234
    %v2256 = vmul.f32 %v2235, %v2235
    %v2257 = vmul.f32 %v2236, %v2236
    %v2258 = vmul.f32 %v2237, %v2237
    %v2259 = vadd.f32 %v2255, %v2256
    %2260 = vadd.xlane.f32.xlu0 %v2259
    %v2261 = vpop.xlane.xlu0 %2260
    %v2262 = vadd.f32 %v2257, %v2258
    %2263 = vadd.xlane.f32.xlu0 %v2262
    %v2264 = vpop.xlane.xlu0 %2263
    %v2265 = vmul.f32 %v2261, %v2252
    %v2266 = vmul.f32 %v2264, %v2252
    %v2267 = vmul.f32 %v2253, %v2253
    %v2268 = vmul.f32 %v2254, %v2254
    %v2269 = vsub.f32 %v2265, %v2267
    %v2270 = vsub.f32 %v2266, %v2268
    %v2271 = vmax.f32 %v2269, 0.0
    %v2272 = vmax.f32 %v2270, 0.0
    %v2273 = vsub.f32 %v2234, %v2253
    %v2274 = vsub.f32 %v2235, %v2253
    %v2275 = vsub.f32 %v2236, %v2254
    %v2276 = vsub.f32 %v2237, %v2254
    %v2277 = vadd.f32 %v2271, 1e-05
    %v2278 = vadd.f32 %v2272, 1e-05
    %v2279 = vrsqrt.pop %v2277
    %v2280 = vmul.f32 %v2279, %v2277
    %v2281 = vmul.f32 %v2280, %v2279
    %v2282 = vmul.f32 0.5, %v2281
    %v2283 = vsub.f32 1.5, %v2282
    %v2284 = vmul.f32 %v2279, %v2283
    %vm2285 = vweird.f32 %v2277
    %vm2286 = vweird.f32 %v2279
    %vm2287 = vmor %vm2285, %vm2286
    %v2288 = vsel %vm2287, %v2279, %v2284
    %v2289 = vrsqrt.pop %v2278
    %v2290 = vmul.f32 %v2289, %v2278
    %v2291 = vmul.f32 %v2290, %v2289
    %v2292 = vmul.f32 0.5, %v2291
    %v2293 = vsub.f32 1.5, %v2292
    %v2294 = vmul.f32 %v2289, %v2293
    %vm2295 = vweird.f32 %v2278
    %vm2296 = vweird.f32 %v2289
    %vm2297 = vmor %vm2295, %vm2296
    %v2298 = vsel %vm2297, %v2289, %v2294
    %v2299 = vmul.f32 %v2273, %v2288
    %v2300 = vmul.f32 %v2274, %v2288
    %v2301 = vmul.f32 %v2275, %v2298
    %v2302 = vmul.f32 %v2276, %v2298
    %v2304 = vperm.slane %v2238, 0
    %v2305 = vperm.slane %v2238, 1
    %v2308 = vmul.f32 %v2299, %v2304
    %v2309 = vmul.f32 %v2300, %v2305
    %v2310 = vmul.f32 %v2301, %v2304
    %v2311 = vmul.f32 %v2302, %v2305
    %v2313 = vperm.slane %v2239, 0
    %v2314 = vperm.slane %v2239, 1
    %v2317 = vadd.f32 %v2308, %v2313
    %v2318 = vadd.f32 %v2309, %v2314
    %v2319 = vadd.f32 %v2310, %v2313
    %v2320 = vadd.f32 %v2311, %v2314
    %v2321 = vpack.c.bf16 %v2318, %v2317
    %v2322 = vpack.c.bf16 %v2320, %v2319
    %v2323 = vld [vmem:[#allocation10] sm:$0xff]
    %v2324 = vld [vmem:[#allocation10 + $0x8] sm:$0xff]
    %v2325 = vunpack.c.l.bf16 %v2321
    %v2326 = vunpack.c.h.bf16 %v2321
    %v2327 = vunpack.c.l.bf16 %v2322
    %v2328 = vunpack.c.h.bf16 %v2322
    %v2329 = vunpack.c.l.bf16 %v2323
    %v2330 = vunpack.c.h.bf16 %v2323
    %v2331 = vunpack.c.l.bf16 %v2324
    %v2332 = vunpack.c.h.bf16 %v2324
    %v2333 = vmul.f32 %v2325, %v2329
    %v2334 = vmul.f32 %v2326, %v2330
    %v2335 = vmul.f32 %v2327, %v2331
    %v2336 = vmul.f32 %v2328, %v2332
    %v2337 = vpack.c.bf16 %v2335, %v2333
    %v2338 = vpack.c.bf16 %v2336, %v2334
    %v2339 = vld [vmem:[#allocation23] sm:$0xf]
    %v2340 = vld [vmem:[#allocation23 + $0x4] sm:$0xf]
    %v2341 = vld [vmem:[#allocation23 + $0x8] sm:$0xf]
    %v2342 = vld [vmem:[#allocation23 + $0xc] sm:$0xf]
    %v2343 = vld [vmem:[#allocation23 + $0x10] sm:$0xf]
    %v2344 = vld [vmem:[#allocation23 + $0x14] sm:$0xf]
    %v2345 = vld [vmem:[#allocation23 + $0x18] sm:$0xf]
    %v2346 = vld [vmem:[#allocation23 + $0x1c] sm:$0xf]
    %v2347 = vld [vmem:[#allocation23 + $0x20] sm:$0xf]
    %v2348 = vld [vmem:[#allocation23 + $0x24] sm:$0xf]
    %v2349 = vld [vmem:[#allocation23 + $0x28] sm:$0xf]
    %v2350 = vld [vmem:[#allocation23 + $0x2c] sm:$0xf]
    %v2351 = vld [vmem:[#allocation23 + $0x30] sm:$0xf]
    %v2352 = vld [vmem:[#allocation23 + $0x34] sm:$0xf]
    %v2353 = vld [vmem:[#allocation23 + $0x38] sm:$0xf]
    %v2354 = vld [vmem:[#allocation23 + $0x3c] sm:$0xf]
    %v2355 = vld [vmem:[#allocation23 + $0x40] sm:$0xf]
    %v2356 = vld [vmem:[#allocation23 + $0x44] sm:$0xf]
    %v2357 = vld [vmem:[#allocation23 + $0x48] sm:$0xf]
    %v2358 = vld [vmem:[#allocation23 + $0x4c] sm:$0xf]
    %v2359 = vld [vmem:[#allocation23 + $0x50] sm:$0xf]
    %v2360 = vld [vmem:[#allocation23 + $0x54] sm:$0xf]
    %v2361 = vld [vmem:[#allocation23 + $0x58] sm:$0xf]
    %v2362 = vld [vmem:[#allocation23 + $0x5c] sm:$0xf]
    %v2363 = vld [vmem:[#allocation23 + $0x60] sm:$0xf]
    %v2364 = vld [vmem:[#allocation23 + $0x64] sm:$0xf]
    %v2365 = vld [vmem:[#allocation23 + $0x68] sm:$0xf]
    %v2366 = vld [vmem:[#allocation23 + $0x6c] sm:$0xf]
    %v2367 = vld [vmem:[#allocation23 + $0x70] sm:$0xf]
    %v2368 = vld [vmem:[#allocation23 + $0x74] sm:$0xf]
    %v2369 = vld [vmem:[#allocation23 + $0x78] sm:$0xf]
    %v2370 = vld [vmem:[#allocation23 + $0x7c] sm:$0xf]
    %v2371 = vld [vmem:[%s23] sm:$0x1]
    %v2373 = vperm.slane %v2371, 0
    %v2407 = vunpack.c.l.b16 %v2339
    %v2408 = vunpack.c.l.b16 %v2340
    %v2409 = vunpack.c.l.b16 %v2341
    %v2410 = vunpack.c.l.b16 %v2342
    %v2411 = vunpack.c.l.b16 %v2343
    %v2412 = vunpack.c.l.b16 %v2344
    %v2413 = vunpack.c.l.b16 %v2345
    %v2414 = vunpack.c.l.b16 %v2346
    %v2415 = vunpack.c.l.b16 %v2347
    %v2416 = vunpack.c.l.b16 %v2348
    %v2417 = vunpack.c.l.b16 %v2349
    %v2418 = vunpack.c.l.b16 %v2350
    %v2419 = vunpack.c.l.b16 %v2351
    %v2420 = vunpack.c.l.b16 %v2352
    %v2421 = vunpack.c.l.b16 %v2353
    %v2422 = vunpack.c.l.b16 %v2354
    %v2423 = vunpack.c.l.b16 %v2355
    %v2424 = vunpack.c.l.b16 %v2356
    %v2425 = vunpack.c.l.b16 %v2357
    %v2426 = vunpack.c.l.b16 %v2358
    %v2427 = vunpack.c.l.b16 %v2359
    %v2428 = vunpack.c.l.b16 %v2360
    %v2429 = vunpack.c.l.b16 %v2361
    %v2430 = vunpack.c.l.b16 %v2362
    %v2431 = vunpack.c.l.b16 %v2363
    %v2432 = vunpack.c.l.b16 %v2364
    %v2433 = vunpack.c.l.b16 %v2365
    %v2434 = vunpack.c.l.b16 %v2366
    %v2435 = vunpack.c.l.b16 %v2367
    %v2436 = vunpack.c.l.b16 %v2368
    %v2437 = vunpack.c.l.b16 %v2369
    %v2438 = vunpack.c.l.b16 %v2370
    %v2439 = vpack.c.b16 %v2408, %v2407
    %v2440 = vpack.c.b16 %v2410, %v2409
    %v2441 = vpack.c.b16 %v2412, %v2411
    %v2442 = vpack.c.b16 %v2414, %v2413
    %v2443 = vpack.c.b16 %v2416, %v2415
    %v2444 = vpack.c.b16 %v2418, %v2417
    %v2445 = vpack.c.b16 %v2420, %v2419
    %v2446 = vpack.c.b16 %v2422, %v2421
    %v2447 = vpack.c.b16 %v2424, %v2423
    %v2448 = vpack.c.b16 %v2426, %v2425
    %v2449 = vpack.c.b16 %v2428, %v2427
    %v2450 = vpack.c.b16 %v2430, %v2429
    %v2451 = vpack.c.b16 %v2432, %v2431
    %v2452 = vpack.c.b16 %v2434, %v2433
    %v2453 = vpack.c.b16 %v2436, %v2435
    %v2454 = vpack.c.b16 %v2438, %v2437
    %2471 = vmatpush.bf16.msra.mxu0 %v2446
    %2472 = vmatpush.bf16.msra.mxu0 %v2445
    %2473 = vmatpush.bf16.msra.mxu0 %v2444
    %2474 = vmatpush.bf16.msra.mxu0 %v2443
    %2475 = vmatpush.bf16.msra.mxu0 %v2442
    %2476 = vmatpush.bf16.msra.mxu0 %v2441
    %2477 = vmatpush.bf16.msra.mxu0 %v2440
    %2478 = vmatpush.bf16.msra.mxu0 %v2439
    %2479 = vmatmul.bf16.gmra.mxu0 %v2337
    %v2480 = vpop.f32.mrf.mxu0
    %v2481 = vadd.f32 %v2373, %v2480
    %v2482 = vpop.f32.mrf.mxu0
    %v2483 = vadd.f32 %v2373, %v2482
    %2484 = vdwg.mxu0
    %2485 = vmatpush.bf16.msra.mxu0 %v2454
    %2486 = vmatpush.bf16.msra.mxu0 %v2453
    %2487 = vmatpush.bf16.msra.mxu0 %v2452
    %2488 = vmatpush.bf16.msra.mxu0 %v2451
    %2489 = vmatpush.bf16.msra.mxu0 %v2450
    %2490 = vmatpush.bf16.msra.mxu0 %v2449
    %2491 = vmatpush.bf16.msra.mxu0 %v2448
    %2492 = vmatpush.bf16.msra.mxu0 %v2447
    %2493 = vmatmul.bf16.gmra.mxu0 %v2338
    %v2494 = vpop.f32.mrf.mxu0
    %v2495 = vadd.f32 %v2481, %v2494
    %v2496 = vpop.f32.mrf.mxu0
    %v2497 = vadd.f32 %v2483, %v2496
    %2498 = vdwg.mxu0
    %v2499 = vadd.f32 %v2495, %v2101
    %v2500 = vadd.f32 %v2497, %v2102
    %v2501 = vld [vmem:[%s24] sm:$0x1]
    %v2502 = vld [vmem:[%s25] sm:$0x1]
    %2503 = vadd.xlane.f32.xlu0 %v2499
    %v2504 = vpop.xlane.xlu0 %2503
    %2505 = vadd.xlane.f32.xlu0 %v2500
    %v2506 = vpop.xlane.xlu0 %2505
    %v2507 = vmul.f32 %v2504, %v1155
    %v2508 = vmul.f32 %v2506, %v1155
    %v2509 = vmul.f32 %v2499, %v2499
    %v2510 = vmul.f32 %v2500, %v2500
    %2511 = vadd.xlane.f32.xlu0 %v2509
    %v2512 = vpop.xlane.xlu0 %2511
    %2513 = vadd.xlane.f32.xlu0 %v2510
    %v2514 = vpop.xlane.xlu0 %2513
    %v2515 = vmul.f32 %v2512, %v1155
    %v2516 = vmul.f32 %v2514, %v1155
    %v2517 = vmul.f32 %v2507, %v2507
    %v2518 = vmul.f32 %v2508, %v2508
    %v2519 = vsub.f32 %v2515, %v2517
    %v2520 = vsub.f32 %v2516, %v2518
    %v2521 = vmax.f32 %v2519, 0.0
    %v2522 = vmax.f32 %v2520, 0.0
    %v2523 = vsub.f32 %v2499, %v2507
    %v2524 = vsub.f32 %v2500, %v2508
    %v2525 = vadd.f32 %v2521, 1e-05
    %v2526 = vadd.f32 %v2522, 1e-05
    %v2527 = vrsqrt.pop %v2525
    %v2528 = vmul.f32 %v2527, %v2525
    %v2529 = vmul.f32 %v2528, %v2527
    %v2530 = vmul.f32 0.5, %v2529
    %v2531 = vsub.f32 1.5, %v2530
    %v2532 = vmul.f32 %v2527, %v2531
    %vm2533 = vweird.f32 %v2525
    %vm2534 = vweird.f32 %v2527
    %vm2535 = vmor %vm2533, %vm2534
    %v2536 = vsel %vm2535, %v2527, %v2532
    %v2537 = vrsqrt.pop %v2526
    %v2538 = vmul.f32 %v2537, %v2526
    %v2539 = vmul.f32 %v2538, %v2537
    %v2540 = vmul.f32 0.5, %v2539
    %v2541 = vsub.f32 1.5, %v2540
    %v2542 = vmul.f32 %v2537, %v2541
    %vm2543 = vweird.f32 %v2526
    %vm2544 = vweird.f32 %v2537
    %vm2545 = vmor %vm2543, %vm2544
    %v2546 = vsel %vm2545, %v2537, %v2542
    %v2547 = vmul.f32 %v2523, %v2536
    %v2548 = vmul.f32 %v2524, %v2546
    %v2550 = vperm.slane %v2501, 0
    %v2552 = vmul.f32 %v2547, %v2550
    %v2553 = vmul.f32 %v2548, %v2550
    %v2555 = vperm.slane %v2502, 0
    %v2557 = vadd.f32 %v2552, %v2555
    %v2558 = vadd.f32 %v2553, %v2555
    %2559 = vst [vmem:[#allocation25] sm:$0xff] %v2557
    %2560 = vst [vmem:[#allocation25 + $0x8] sm:$0xff] %v2558
    // Predicated region
    $region162: #{tpu_custom_call.1} parent=1 // pred_check
      _
    $region163: #{tpu_custom_call.1} parent=1 // pred_check_branch
      %2562 = sbr.rel (0) target = $region165
    $region164: #{tpu_custom_call.1} parent=1 // pred_region
      %2564 = vsyncadd [#allocation4], 0
      %s2565 = sshll.u32 [#allocation25], 4
      %s2566 = int_to_ptr.vmem [resolvable:$true] %s2565
      %s2567 = sshll.u32 %s26, 4
      %s2568 = int_to_ptr.hbm [resolvable:$true] %s2567
      %2573 = dma.vmem_to_hbm [thread:$0]  %s2566, 256, %s2568, [#allocation4], 128, 128, 8
    $region165: #{tpu_custom_call.1} parent=1 // pred_fallthru
      _
    // Predicated region
    $region166: #{tpu_custom_call.1} parent=1 // pred_check
      _
    $region167: #{tpu_custom_call.1} parent=1 // pred_check_branch
      %2575 = sbr.rel (0) target = $region169
    $region168: #{tpu_custom_call.1} parent=1 // pred_region
      %2577 = dma.done [#allocation4], 256
    $region169: #{tpu_custom_call.1} parent=1 // pred_fallthru
      _
    %2578 = vsyncpa [#allocation3], 1
    %2579 = vsyncpa [#allocation6], 1
    %2580 = vsyncpa [#allocation9], 1
    %2581 = vsyncpa [#allocation12], 1
    %2582 = vsyncpa [#allocation15], 1
    %2583 = vsyncpa [#allocation18], 1
    %2584 = vsyncpa [#allocation21], 1
    %2585 = vsyncpa [#allocation24], 1
    %2586 = vsyncpa [#allocation4], 1

</llo_original>
